<compile_context>
chip_gen: v6e
topology: v6e:2x2x1
jax: 0.10.0
libtpu: 0.0.40
codegen_flags: <defaults>
</compile_context>

<pallas_src>
import functools

import jax
import jax.numpy as jnp
from jax import lax
from jax.experimental import pallas as pl
from jax.experimental.pallas import tpu as pltpu

LN_EPS = 1e-5


def _round_up(a: int, b: int) -> int:
    return (a + b - 1) // b * b


def tds_fc_kernel(x_ref, w1_ref, b1_ref, w2_ref, b2_ref, g_ref, beta_ref, o_ref,
                  *, feat: int):
    """One (row_tile, Fp) tile.  `feat` = real (unpadded) feature count."""
    x_in = x_ref[...]                       # (TM, Fp), input dtype (no blanket f32 cast)
    x_mx = x_in.astype(jnp.bfloat16)        # MXU consumes bf16 directly

    # fc_block: Linear -> ReLU -> Linear (weights pre-transposed: (in, out), bf16)
    h = jnp.dot(x_mx, w1_ref[...], preferred_element_type=jnp.float32) + b1_ref[...]
    h = jnp.maximum(h, 0.0)
    y = jnp.dot(h.astype(jnp.bfloat16), w2_ref[...],
                preferred_element_type=jnp.float32) + b2_ref[...]

    # residual (f32)
    y = y + x_in.astype(jnp.float32)

    # LayerNorm over the REAL `feat` features.  Padded lanes of y are exactly
    # zero (zero-padded inputs/weights/biases), so the sum needs no mask; the
    # centered term does (y - mean != 0 on padded lanes).
    fp = y.shape[-1]
    col = lax.broadcasted_iota(jnp.int32, (1, fp), 1)
    lane_mask = col < feat
    inv_f = 1.0 / feat
    mean = jnp.sum(y, axis=-1, keepdims=True) * inv_f
    centered = jnp.where(lane_mask, y - mean, 0.0)
    var = jnp.sum(centered * centered, axis=-1, keepdims=True) * inv_f
    y_hat = centered * lax.rsqrt(var + LN_EPS)
    out = y_hat * g_ref[...] + beta_ref[...]          # padded gamma/beta are 0 -> 0

    o_ref[...] = out.astype(o_ref.dtype)


def prepare_tds_fc_params(w1, b1, w2, b2, gamma, beta):
    """One-time param prep: transpose, pad F -> multiple of 128, cast weights to bf16."""
    F = w1.shape[0]
    Fp = _round_up(F, 128)
    pad_f = Fp - F

    def pad_mat(w):  # PyTorch (out, in) -> transposed (in, out), zero-padded, bf16
        return jnp.pad(w.T.astype(jnp.bfloat16), ((0, pad_f), (0, pad_f)))

    def pad_vec(v):  # (F,) -> (1, Fp) f32, zero-padded
        return jnp.pad(v.astype(jnp.float32), (0, pad_f)).reshape(1, Fp)

    return {
        "num_features": F,
        "w1t": pad_mat(w1), "b1": pad_vec(b1),
        "w2t": pad_mat(w2), "b2": pad_vec(b2),
        "gamma": pad_vec(gamma), "beta": pad_vec(beta),
    }


def tds_fully_connected_block(x, params, *, row_tile=256):
    """x: (T, N, F);  params: output of prepare_tds_fc_params."""
    T, N, F = x.shape
    assert F == params["num_features"]
    Fp = params["w1t"].shape[0]
    rows = T * N

    # Row tile: multiple of 8, no larger than the (padded) row count.
    row_tile = _round_up(max(8, row_tile), 8)
    row_tile = min(row_tile, _round_up(rows, 8))
    rows_p = _round_up(rows, row_tile)

    # Flatten and zero-pad rows + features (lane-dense last dim).
    x2d = jnp.pad(x.reshape(rows, F), ((0, rows_p - rows), (0, Fp - F)))

    grid = (rows_p // row_tile,)

    kernel = functools.partial(tds_fc_kernel, feat=F)

    itemsize = jnp.dtype(x.dtype).itemsize
    cost = pl.CostEstimate(
        flops=4 * rows_p * Fp * Fp + 10 * rows_p * Fp,
        transcendentals=rows_p,
        bytes_accessed=2 * rows_p * Fp * itemsize + 2 * Fp * Fp * 2 + 4 * Fp * 4,
    )

    out2d = pl.pallas_call(
        kernel,
        out_shape=jax.ShapeDtypeStruct((rows_p, Fp), x.dtype),
        grid_spec=pltpu.PrefetchScalarGridSpec(
            num_scalar_prefetch=0,
            grid=grid,
            in_specs=[
                pl.BlockSpec((row_tile, Fp), lambda i: (i, 0)),  # x tile
                pl.BlockSpec((Fp, Fp), lambda i: (0, 0)),         # W1^T (bf16, resident)
                pl.BlockSpec((1, Fp), lambda i: (0, 0)),          # b1
                pl.BlockSpec((Fp, Fp), lambda i: (0, 0)),         # W2^T (bf16, resident)
                pl.BlockSpec((1, Fp), lambda i: (0, 0)),          # b2
                pl.BlockSpec((1, Fp), lambda i: (0, 0)),          # gamma
                pl.BlockSpec((1, Fp), lambda i: (0, 0)),          # beta
            ],
            out_specs=pl.BlockSpec((row_tile, Fp), lambda i: (i, 0)),
        ),
        compiler_params=pltpu.CompilerParams(
            dimension_semantics=("parallel",),
            vmem_limit_bytes=48 * 1024 * 1024,   # above defaults, below v7x physical
        ),
        cost_estimate=cost,
    )(x2d, params["w1t"], params["b1"], params["w2t"], params["b2"],
      params["gamma"], params["beta"])

    return out2d[:rows, :F].reshape(T, N, F)


def _reference(x, w1, b1, w2, b2, gamma, beta):
    """Plain-JAX f32 reference mirroring the PyTorch forward."""
    h = jnp.maximum(x @ w1.T + b1, 0.0)
    y = h @ w2.T + b2
    y = y + x
    mean = jnp.mean(y, axis=-1, keepdims=True)
    var = jnp.mean((y - mean) ** 2, axis=-1, keepdims=True)
    return (y - mean) / jnp.sqrt(var + LN_EPS) * gamma + beta


if __name__ == "__main__":
    # (T, N, num_features) — small, but enough rows for 2 full 256-row tiles
    # so both v7x TensorCores get a grid step.
    T, N, F = 64, 8, 32

    key = jax.random.PRNGKey(0)
    k_x, k_w1, k_b1, k_w2, k_b2 = jax.random.split(key, 5)

    x = jax.random.normal(k_x, (T, N, F), dtype=jnp.float32)

    # PyTorch Linear-style uniform init (bound 1/sqrt(F)); LayerNorm default affine.
    bound = 1.0 / (F ** 0.5)
    w1 = jax.random.uniform(k_w1, (F, F), jnp.float32, -bound, bound)  # (out, in)
    b1 = jax.random.uniform(k_b1, (F,), jnp.float32, -bound, bound)
    w2 = jax.random.uniform(k_w2, (F, F), jnp.float32, -bound, bound)
    b2 = jax.random.uniform(k_b2, (F,), jnp.float32, -bound, bound)
    gamma = jnp.ones((F,), jnp.float32)
    beta = jnp.zeros((F,), jnp.float32)

    params = prepare_tds_fc_params(w1, b1, w2, b2, gamma, beta)  # once, not per forward

    out = tds_fully_connected_block(x, params, row_tile=256)
    out = jax.block_until_ready(out)

    ref = _reference(x, w1, b1, w2, b2, gamma, beta)
    assert out.shape == (T, N, F)
    # bf16 MXU inputs with f32 accumulation: allow bf16-level tolerance vs f32 ref.
    err = jnp.max(jnp.abs(out - ref))
    assert err < 5e-2, f"mismatch vs reference: max abs err = {err}"

    print("KERNEL_OK")
</pallas_src>

<mosaic_0001>
module attributes {stable_mosaic.version = 11 : i64} {
  func.func @tds_fc_kernel(%arg0: i32, %arg1: memref<256x128xf32, #tpu.memory_space<vmem>>, %arg2: memref<128x128xbf16, #tpu.memory_space<vmem>>, %arg3: memref<1x128xf32, #tpu.memory_space<vmem>>, %arg4: memref<128x128xbf16, #tpu.memory_space<vmem>>, %arg5: memref<1x128xf32, #tpu.memory_space<vmem>>, %arg6: memref<1x128xf32, #tpu.memory_space<vmem>>, %arg7: memref<1x128xf32, #tpu.memory_space<vmem>>, %arg8: memref<256x128xf32, #tpu.memory_space<vmem>>) attributes {dimension_semantics = [#tpu.dimension_semantics<parallel>], iteration_bounds = array<i64: 2>, scalar_prefetch = 0 : i64, scratch_operands = 0 : i64, tpu.core_type = #tpu.core_type<tc>, window_params = [{transform_indices = @transform_0, window_bounds = array<i64: 256, 128>}, {pipeline_mode = #tpu.pipeline_mode<synchronous>, transform_indices = @transform_1, window_bounds = array<i64: 128, 128>}, {pipeline_mode = #tpu.pipeline_mode<synchronous>, transform_indices = @transform_2, window_bounds = array<i64: 1, 128>}, {pipeline_mode = #tpu.pipeline_mode<synchronous>, transform_indices = @transform_3, window_bounds = array<i64: 128, 128>}, {pipeline_mode = #tpu.pipeline_mode<synchronous>, transform_indices = @transform_4, window_bounds = array<i64: 1, 128>}, {pipeline_mode = #tpu.pipeline_mode<synchronous>, transform_indices = @transform_5, window_bounds = array<i64: 1, 128>}, {pipeline_mode = #tpu.pipeline_mode<synchronous>, transform_indices = @transform_6, window_bounds = array<i64: 1, 128>}, {transform_indices = @transform_7, window_bounds = array<i64: 256, 128>}]} {
    %c0 = arith.constant 0 : index
    %c0_0 = arith.constant 0 : index
    %0 = vector.load %arg1[%c0, %c0_0] : memref<256x128xf32, #tpu.memory_space<vmem>>, vector<256x128xf32>
    %1 = arith.truncf %0 : vector<256x128xf32> to vector<256x128xbf16>
    %c0_1 = arith.constant 0 : index
    %c0_2 = arith.constant 0 : index
    %2 = vector.load %arg2[%c0_1, %c0_2] : memref<128x128xbf16, #tpu.memory_space<vmem>>, vector<128x128xbf16>
    %cst = arith.constant dense<0.000000e+00> : vector<256x128xf32>
    %3 = tpu.matmul %1, %2, %cst {dimension_numbers = #tpu.dot_dimension_numbers<[1], [0], [0], [1], [0, 0, 1, 1], [], []>} : vector<256x128xbf16>, vector<128x128xbf16>, vector<256x128xf32> -> vector<256x128xf32>
    %c0_3 = arith.constant 0 : index
    %c0_4 = arith.constant 0 : index
    %4 = vector.load %arg3[%c0_3, %c0_4] : memref<1x128xf32, #tpu.memory_space<vmem>>, vector<1x128xf32>
    %5 = vector.broadcast %4 : vector<1x128xf32> to vector<256x128xf32>
    %6 = arith.addf %3, %5 : vector<256x128xf32>
    %cst_5 = arith.constant 0.000000e+00 : f32
    %7 = vector.broadcast %cst_5 : f32 to vector<256x128xf32>
    %8 = arith.maximumf %6, %7 : vector<256x128xf32>
    %9 = arith.truncf %8 : vector<256x128xf32> to vector<256x128xbf16>
    %c0_6 = arith.constant 0 : index
    %c0_7 = arith.constant 0 : index
    %10 = vector.load %arg4[%c0_6, %c0_7] : memref<128x128xbf16, #tpu.memory_space<vmem>>, vector<128x128xbf16>
    %cst_8 = arith.constant dense<0.000000e+00> : vector<256x128xf32>
    %11 = tpu.matmul %9, %10, %cst_8 {dimension_numbers = #tpu.dot_dimension_numbers<[1], [0], [0], [1], [0, 0, 1, 1], [], []>} : vector<256x128xbf16>, vector<128x128xbf16>, vector<256x128xf32> -> vector<256x128xf32>
    %c0_9 = arith.constant 0 : index
    %c0_10 = arith.constant 0 : index
    %12 = vector.load %arg5[%c0_9, %c0_10] : memref<1x128xf32, #tpu.memory_space<vmem>>, vector<1x128xf32>
    %13 = vector.broadcast %12 : vector<1x128xf32> to vector<256x128xf32>
    %14 = arith.addf %11, %13 : vector<256x128xf32>
    %15 = arith.addf %14, %0 : vector<256x128xf32>
    %16 = tpu.iota {dimensions = array<i32: 1>} : vector<1x128xi32>
    %c32_i32 = arith.constant 32 : i32
    %17 = vector.broadcast %c32_i32 : i32 to vector<1x128xi32>
    %18 = arith.cmpi slt, %16, %17 : vector<1x128xi32>
    %cst_11 = arith.constant dense<0.000000e+00> : vector<256xf32>
    %19 = vector.multi_reduction <add>, %15, %cst_11 [1] : vector<256x128xf32> to vector<256xf32>
    %20 = vector.shape_cast %19 : vector<256xf32> to vector<256x1xf32>
    %cst_12 = arith.constant 3.125000e-02 : f32
    %21 = vector.broadcast %cst_12 : f32 to vector<256x1xf32>
    %22 = arith.mulf %20, %21 : vector<256x1xf32>
    %23 = vector.broadcast %22 : vector<256x1xf32> to vector<256x128xf32>
    %24 = arith.subf %15, %23 : vector<256x128xf32>
    %cst_13 = arith.constant 0.000000e+00 : f32
    %25 = vector.shape_cast %18 : vector<1x128xi1> to vector<1x128xi1>
    %26 = vector.broadcast %25 : vector<1x128xi1> to vector<256x128xi1>
    %27 = vector.broadcast %cst_13 : f32 to vector<256x128xf32>
    %28 = arith.select %26, %24, %27 : vector<256x128xi1>, vector<256x128xf32>
    %29 = arith.mulf %28, %28 : vector<256x128xf32>
    %cst_14 = arith.constant dense<0.000000e+00> : vector<256xf32>
    %30 = vector.multi_reduction <add>, %29, %cst_14 [1] : vector<256x128xf32> to vector<256xf32>
    %31 = vector.shape_cast %30 : vector<256xf32> to vector<256x1xf32>
    %cst_15 = arith.constant 3.125000e-02 : f32
    %32 = vector.broadcast %cst_15 : f32 to vector<256x1xf32>
    %33 = arith.mulf %31, %32 : vector<256x1xf32>
    %cst_16 = arith.constant 9.99999974E-6 : f32
    %34 = vector.broadcast %cst_16 : f32 to vector<256x1xf32>
    %35 = arith.addf %33, %34 : vector<256x1xf32>
    %36 = math.rsqrt %35 : vector<256x1xf32>
    %37 = vector.broadcast %36 : vector<256x1xf32> to vector<256x128xf32>
    %38 = arith.mulf %28, %37 : vector<256x128xf32>
    %c0_17 = arith.constant 0 : index
    %c0_18 = arith.constant 0 : index
    %39 = vector.load %arg6[%c0_17, %c0_18] : memref<1x128xf32, #tpu.memory_space<vmem>>, vector<1x128xf32>
    %40 = vector.broadcast %39 : vector<1x128xf32> to vector<256x128xf32>
    %41 = arith.mulf %38, %40 : vector<256x128xf32>
    %c0_19 = arith.constant 0 : index
    %c0_20 = arith.constant 0 : index
    %42 = vector.load %arg7[%c0_19, %c0_20] : memref<1x128xf32, #tpu.memory_space<vmem>>, vector<1x128xf32>
    %43 = vector.broadcast %42 : vector<1x128xf32> to vector<256x128xf32>
    %44 = arith.addf %41, %43 : vector<256x128xf32>
    %c0_21 = arith.constant 0 : index
    %c0_22 = arith.constant 0 : index
    %45 = vector.load %arg8[%c0_21, %c0_22] : memref<256x128xf32, #tpu.memory_space<vmem>>, vector<256x128xf32>
    tpu.vector_store %arg8[%c0_21, %c0_22], %44 {strides = array<i32>} : memref<256x128xf32, #tpu.memory_space<vmem>>, vector<256x128xf32>,
    return
  }
  func.func @transform_0(%arg0: i32) -> (i32, i32) {
    %c0_i32 = arith.constant 0 : i32
    %c0_i32_0 = arith.constant 0 : i32
    return %arg0, %c0_i32 : i32, i32
  }
  func.func @transform_1(%arg0: i32) -> (i32, i32) {
    %c0_i32 = arith.constant 0 : i32
    %c0_i32_0 = arith.constant 0 : i32
    %c0_i32_1 = arith.constant 0 : i32
    return %c0_i32, %c0_i32_0 : i32, i32
  }
  func.func @transform_2(%arg0: i32) -> (i32, i32) {
    %c0_i32 = arith.constant 0 : i32
    %c0_i32_0 = arith.constant 0 : i32
    %c0_i32_1 = arith.constant 0 : i32
    return %c0_i32, %c0_i32_0 : i32, i32
  }
  func.func @transform_3(%arg0: i32) -> (i32, i32) {
    %c0_i32 = arith.constant 0 : i32
    %c0_i32_0 = arith.constant 0 : i32
    %c0_i32_1 = arith.constant 0 : i32
    return %c0_i32, %c0_i32_0 : i32, i32
  }
  func.func @transform_4(%arg0: i32) -> (i32, i32) {
    %c0_i32 = arith.constant 0 : i32
    %c0_i32_0 = arith.constant 0 : i32
    %c0_i32_1 = arith.constant 0 : i32
    return %c0_i32, %c0_i32_0 : i32, i32
  }
  func.func @transform_5(%arg0: i32) -> (i32, i32) {
    %c0_i32 = arith.constant 0 : i32
    %c0_i32_0 = arith.constant 0 : i32
    %c0_i32_1 = arith.constant 0 : i32
    return %c0_i32, %c0_i32_0 : i32, i32
  }
  func.func @transform_6(%arg0: i32) -> (i32, i32) {
    %c0_i32 = arith.constant 0 : i32
    %c0_i32_0 = arith.constant 0 : i32
    %c0_i32_1 = arith.constant 0 : i32
    return %c0_i32, %c0_i32_0 : i32, i32
  }
  func.func @transform_7(%arg0: i32) -> (i32, i32) {
    %c0_i32 = arith.constant 0 : i32
    %c0_i32_0 = arith.constant 0 : i32
    return %arg0, %c0_i32 : i32, i32
  }
}

</mosaic_0001>

<llo_original>
// kernel: tpu_custom_call.1
$region0: #{tpu_custom_call.1}
  #allocation0 [shape = 'u32[]', space=smem, size = 0x4, offset = 0x4, fixed_abs, tag = 'smem constant byte address 0x4 - core index']
  #allocation1 [shape = 'u32[144,128]{1,0:T(1,128)}', space=vmem, size = 0x12000, scoped, tag = 'internal scratch']
  %s0 = inlined_call_operand.hbm [shape: f32[512,128], index: 0, kind: input, shape index: {}]
  %s1 = inlined_call_operand.hbm [shape: bf16[128,128], index: 1, kind: input, shape index: {}]
  %s2 = inlined_call_operand.vmem [shape: f32[1,128], index: 2, kind: input, shape index: {}]
  %s3 = inlined_call_operand.hbm [shape: bf16[128,128], index: 3, kind: input, shape index: {}]
  %s4 = inlined_call_operand.vmem [shape: f32[1,128], index: 4, kind: input, shape index: {}]
  %s5 = inlined_call_operand.vmem [shape: f32[1,128], index: 5, kind: input, shape index: {}]
  %s6 = inlined_call_operand.vmem [shape: f32[1,128], index: 6, kind: input, shape index: {}]
  %s7 = inlined_call_operand.hbm [shape: f32[512,128], index: 7, kind: output, shape index: {}]
  %s8 = sld [smem:[#allocation0]]
  $region73: #{tpu_custom_call.1} parent=0
    _
  %s10 = ssub.s32 1, %s8
  %s11 = scalar_select 0, %s10, %s8
  $region1: #{tpu_custom_call.1} parent=0
    #allocation2 [shape = 'u8[262144]{0}', space=vmem, size = 0x40000, scoped, tag = 'input window, operand 0']
    #allocation3 [shape = 's32[2]{0}', space=sflag, size = 0x8, scoped, tag = 'scoped memory for tpu_custom_call.1']
    #allocation4 [shape = 's32[2]{0}', space=sflag, size = 0x8, scoped, tag = 'scoped memory for tpu_custom_call.1']
    #allocation5 [shape = 'u8[32768]{0}', space=vmem, size = 0x8000, scoped, tag = 'input window, operand 1, single buffered']
    #allocation6 [shape = 's32[1]{0}', space=sflag, size = 0x4, scoped, tag = 'scoped memory for tpu_custom_call.1']
    #allocation7 [shape = 'u8[32768]{0}', space=vmem, size = 0x8000, scoped, tag = 'input window, operand 3, single buffered']
    #allocation8 [shape = 'u8[262144]{0}', space=vmem, size = 0x40000, scoped, tag = 'output window, operand 0']
    %12 = vsyncpa [#allocation3], 0
    %s13 = scalar_lea.sflag [#allocation3], 1
    %14 = vsyncpa %s13, 0
    %15 = vsyncpa [#allocation6], 0
    %16 = vsyncpa [#allocation4], 0
    %s17 = scalar_lea.sflag [#allocation4], 1
    %18 = vsyncpa %s17, 0
    loop: start=0, step=1, limit=4
    $region2: #{tpu_custom_call.1} parent=1 // loop_pre_header
      _
    $region3: #{tpu_custom_call.1} parent=1 // loop_header
      %s20 = sphi 0, %s24
      %p21 = scmp.ge.s32.totalorder %s20, 4
      %s30 = sphi 0, %s32
      %s33 = sphi 0, %s30
      %s34 = sphi 0, %s33
      %s50 = sphi 0, %s34
      %s54 = sphi 0, %s54
      %s56 = sphi 0, %s54
      %s57 = sphi 0, %s56
      %s71 = sphi 0, %s57
      %s75 = sphi 0, %s75
      %s77 = sphi 0, %s75
      %s78 = sphi 0, %s77
      %s92 = sphi 0, %s78
      %s96 = sphi 0, %s96
      %s98 = sphi 0, %s96
      %s99 = sphi 0, %s98
      %s113 = sphi 0, %s99
      %s117 = sphi 0, %s117
      %s119 = sphi 0, %s117
      %s120 = sphi 0, %s119
      %s134 = sphi 0, %s120
      %s138 = sphi 0, %s138
      %s140 = sphi 0, %s138
      %s141 = sphi 0, %s140
      %s155 = sphi 0, %s141
      %s159 = sphi 0, %s159
      %s161 = sphi 0, %s159
      %s162 = sphi 0, %s161
      %s176 = sphi 0, %s162
      %s182 = sphi 0, %s184
      %s185 = sphi 0, %s182
      %s186 = sphi 0, %s185
      %s202 = sphi 0, %s186
    $region4: #{tpu_custom_call.1} parent=1 // loop_header_branch
      %23 = sbr.rel (%p21) target = $region8
    $region5: #{tpu_custom_call.1} parent=1 // loop_body
      %s25 = ssub.s32 %s20, 1
      %s26 = ssub.s32 %s20, 2
      %s27 = sadd.s32 %s20, 1
      %s28 = ssub.s32 %s20, %s27
      %p29 = scmp.eq.s32.totalorder %s28, 0
      %s31 = sadd.s32 %s30, 1
      %s32 = scalar_select %p29, %s30, %s31
      %p35 = pneg %p29
      %p36 = scmp.eq.s32.totalorder %s20, 1
      %p37 = por %p35, %p36
      %p38 = scmp.ne.s32.totalorder %s30, %s33
      %p39 = scmp.eq.s32.totalorder %s20, 0
      %p40 = por %p38, %p39
      %p41 = scmp.ne.s32.totalorder %s30, %s33
      %p42 = scmp.eq.s32.totalorder %s25, 1
      %p43 = por %p41, %p42
      %p44 = scmp.ne.s32.totalorder %s33, %s34
      %p45 = scmp.eq.s32.totalorder %s25, 0
      %p46 = por %p44, %p45
      %p47 = scmp.ne.s32.totalorder %s33, %s34
      %p48 = scmp.eq.s32.totalorder %s26, 1
      %p49 = por %p47, %p48
      %p51 = scmp.ne.s32.totalorder %s34, %s50
      %p52 = scmp.eq.s32.totalorder %s26, 0
      %p53 = por %p51, %p52
      %s55 = sadd.s32 %s54, 1
      %p58 = scmp.eq.s32.totalorder %s20, 1
      %p59 = scmp.ne.s32.totalorder %s54, %s56
      %p60 = scmp.eq.s32.totalorder %s20, 0
      %p61 = por %p59, %p60
      %p62 = scmp.ne.s32.totalorder %s54, %s56
      %p63 = scmp.eq.s32.totalorder %s25, 1
      %p64 = por %p62, %p63
      %p65 = scmp.ne.s32.totalorder %s56, %s57
      %p66 = scmp.eq.s32.totalorder %s25, 0
      %p67 = por %p65, %p66
      %p68 = scmp.ne.s32.totalorder %s56, %s57
      %p69 = scmp.eq.s32.totalorder %s26, 1
      %p70 = por %p68, %p69
      %p72 = scmp.ne.s32.totalorder %s57, %s71
      %p73 = scmp.eq.s32.totalorder %s26, 0
      %p74 = por %p72, %p73
      %s76 = sadd.s32 %s75, 1
      %p79 = scmp.eq.s32.totalorder %s20, 1
      %p80 = scmp.ne.s32.totalorder %s75, %s77
      %p81 = scmp.eq.s32.totalorder %s20, 0
      %p82 = por %p80, %p81
      %p83 = scmp.ne.s32.totalorder %s75, %s77
      %p84 = scmp.eq.s32.totalorder %s25, 1
      %p85 = por %p83, %p84
      %p86 = scmp.ne.s32.totalorder %s77, %s78
      %p87 = scmp.eq.s32.totalorder %s25, 0
      %p88 = por %p86, %p87
      %p89 = scmp.ne.s32.totalorder %s77, %s78
      %p90 = scmp.eq.s32.totalorder %s26, 1
      %p91 = por %p89, %p90
      %p93 = scmp.ne.s32.totalorder %s78, %s92
      %p94 = scmp.eq.s32.totalorder %s26, 0
      %p95 = por %p93, %p94
      %s97 = sadd.s32 %s96, 1
      %p100 = scmp.eq.s32.totalorder %s20, 1
      %p101 = scmp.ne.s32.totalorder %s96, %s98
      %p102 = scmp.eq.s32.totalorder %s20, 0
      %p103 = por %p101, %p102
      %p104 = scmp.ne.s32.totalorder %s96, %s98
      %p105 = scmp.eq.s32.totalorder %s25, 1
      %p106 = por %p104, %p105
      %p107 = scmp.ne.s32.totalorder %s98, %s99
      %p108 = scmp.eq.s32.totalorder %s25, 0
      %p109 = por %p107, %p108
      %p110 = scmp.ne.s32.totalorder %s98, %s99
      %p111 = scmp.eq.s32.totalorder %s26, 1
      %p112 = por %p110, %p111
      %p114 = scmp.ne.s32.totalorder %s99, %s113
      %p115 = scmp.eq.s32.totalorder %s26, 0
      %p116 = por %p114, %p115
      %s118 = sadd.s32 %s117, 1
      %p121 = scmp.eq.s32.totalorder %s20, 1
      %p122 = scmp.ne.s32.totalorder %s117, %s119
      %p123 = scmp.eq.s32.totalorder %s20, 0
      %p124 = por %p122, %p123
      %p125 = scmp.ne.s32.totalorder %s117, %s119
      %p126 = scmp.eq.s32.totalorder %s25, 1
      %p127 = por %p125, %p126
      %p128 = scmp.ne.s32.totalorder %s119, %s120
      %p129 = scmp.eq.s32.totalorder %s25, 0
      %p130 = por %p128, %p129
      %p131 = scmp.ne.s32.totalorder %s119, %s120
      %p132 = scmp.eq.s32.totalorder %s26, 1
      %p133 = por %p131, %p132
      %p135 = scmp.ne.s32.totalorder %s120, %s134
      %p136 = scmp.eq.s32.totalorder %s26, 0
      %p137 = por %p135, %p136
      %s139 = sadd.s32 %s138, 1
      %p142 = scmp.eq.s32.totalorder %s20, 1
      %p143 = scmp.ne.s32.totalorder %s138, %s140
      %p144 = scmp.eq.s32.totalorder %s20, 0
      %p145 = por %p143, %p144
      %p146 = scmp.ne.s32.totalorder %s138, %s140
      %p147 = scmp.eq.s32.totalorder %s25, 1
      %p148 = por %p146, %p147
      %p149 = scmp.ne.s32.totalorder %s140, %s141
      %p150 = scmp.eq.s32.totalorder %s25, 0
      %p151 = por %p149, %p150
      %p152 = scmp.ne.s32.totalorder %s140, %s141
      %p153 = scmp.eq.s32.totalorder %s26, 1
      %p154 = por %p152, %p153
      %p156 = scmp.ne.s32.totalorder %s141, %s155
      %p157 = scmp.eq.s32.totalorder %s26, 0
      %p158 = por %p156, %p157
      %s160 = sadd.s32 %s159, 1
      %p163 = scmp.eq.s32.totalorder %s20, 1
      %p164 = scmp.ne.s32.totalorder %s159, %s161
      %p165 = scmp.eq.s32.totalorder %s20, 0
      %p166 = por %p164, %p165
      %p167 = scmp.ne.s32.totalorder %s159, %s161
      %p168 = scmp.eq.s32.totalorder %s25, 1
      %p169 = por %p167, %p168
      %p170 = scmp.ne.s32.totalorder %s161, %s162
      %p171 = scmp.eq.s32.totalorder %s25, 0
      %p172 = por %p170, %p171
      %p173 = scmp.ne.s32.totalorder %s161, %s162
      %p174 = scmp.eq.s32.totalorder %s26, 1
      %p175 = por %p173, %p174
      %p177 = scmp.ne.s32.totalorder %s162, %s176
      %p178 = scmp.eq.s32.totalorder %s26, 0
      %p179 = por %p177, %p178
      %s180 = ssub.s32 %s20, %s27
      %p181 = scmp.eq.s32.totalorder %s180, 0
      %s183 = sadd.s32 %s182, 1
      %s184 = scalar_select %p181, %s182, %s183
      %p187 = pneg %p181
      %p188 = scmp.eq.s32.totalorder %s20, 1
      %p189 = por %p187, %p188
      %p190 = scmp.ne.s32.totalorder %s182, %s185
      %p191 = scmp.eq.s32.totalorder %s20, 0
      %p192 = por %p190, %p191
      %p193 = scmp.ne.s32.totalorder %s182, %s185
      %p194 = scmp.eq.s32.totalorder %s25, 1
      %p195 = por %p193, %p194
      %p196 = scmp.ne.s32.totalorder %s185, %s186
      %p197 = scmp.eq.s32.totalorder %s25, 0
      %p198 = por %p196, %p197
      %p199 = scmp.ne.s32.totalorder %s185, %s186
      %p200 = scmp.eq.s32.totalorder %s26, 1
      %p201 = por %p199, %p200
      %p203 = scmp.ne.s32.totalorder %s186, %s202
      %p204 = scmp.eq.s32.totalorder %s26, 0
      %p205 = por %p203, %p204
      %p206 = scmp.le.s32.totalorder 1, %s20
      %p207 = scmp.lt.s32.totalorder %s20, 3
      %p208 = pnand %p206, %p207
      %p209 = pneg %p208
      // Predicated region
      $region9: #{tpu_custom_call.1} parent=5 // pred_check
        _
      $region10: #{tpu_custom_call.1} parent=5 // pred_check_branch
        %211 = sbr.rel (%p208) target = $region12
      $region11: #{tpu_custom_call.1} parent=5 // pred_region
        %s212 = ssub.s32 %s20, 1
        // Predicated region
        $region13: #{tpu_custom_call.1} parent=11 // pred_check
          %p213 = pneg %p67
        $region14: #{tpu_custom_call.1} parent=11 // pred_check_branch
          %215 = sbr.rel (%p213) target = $region16
        $region15: #{tpu_custom_call.1} parent=11 // pred_region
          %s217 = ssub.s32 1024, 1024
          %218 = vsyncadd [#allocation6], %s217
          %s219 = sshll.u32 [#allocation5], 4
          %s220 = int_to_ptr.vmem [resolvable:$true] %s219
          %225 = dma.hbm_to_vmem [thread:$0]  %s1, 1024, %s220, [#allocation6], 64, 64, 4
        $region16: #{tpu_custom_call.1} parent=11 // pred_fallthru
          _
        // Predicated region
        $region17: #{tpu_custom_call.1} parent=11 // pred_check
          %p226 = pneg %p88
        $region18: #{tpu_custom_call.1} parent=11 // pred_check_branch
          %228 = sbr.rel (%p226) target = $region20
        $region19: #{tpu_custom_call.1} parent=11 // pred_region
          _
        $region20: #{tpu_custom_call.1} parent=11 // pred_fallthru
          _
        // Predicated region
        $region21: #{tpu_custom_call.1} parent=11 // pred_check
          %p229 = pneg %p109
        $region22: #{tpu_custom_call.1} parent=11 // pred_check_branch
          %231 = sbr.rel (%p229) target = $region24
        $region23: #{tpu_custom_call.1} parent=11 // pred_region
          %s233 = ssub.s32 1024, 1024
          %234 = vsyncadd [#allocation6], %s233
          %s235 = sshll.u32 [#allocation7], 4
          %s236 = int_to_ptr.vmem [resolvable:$true] %s235
          %241 = dma.hbm_to_vmem [thread:$0]  %s3, 1024, %s236, [#allocation6], 64, 64, 4
        $region24: #{tpu_custom_call.1} parent=11 // pred_fallthru
          _
        // Predicated region
        $region25: #{tpu_custom_call.1} parent=11 // pred_check
          %p242 = pneg %p130
        $region26: #{tpu_custom_call.1} parent=11 // pred_check_branch
          %244 = sbr.rel (%p242) target = $region28
        $region27: #{tpu_custom_call.1} parent=11 // pred_region
          _
        $region28: #{tpu_custom_call.1} parent=11 // pred_fallthru
          _
        // Predicated region
        $region29: #{tpu_custom_call.1} parent=11 // pred_check
          %p245 = pneg %p151
        $region30: #{tpu_custom_call.1} parent=11 // pred_check_branch
          %247 = sbr.rel (%p245) target = $region32
        $region31: #{tpu_custom_call.1} parent=11 // pred_region
          _
        $region32: #{tpu_custom_call.1} parent=11 // pred_fallthru
          _
        // Predicated region
        $region33: #{tpu_custom_call.1} parent=11 // pred_check
          %p248 = pneg %p172
        $region34: #{tpu_custom_call.1} parent=11 // pred_check_branch
          %250 = sbr.rel (%p248) target = $region36
        $region35: #{tpu_custom_call.1} parent=11 // pred_region
          _
        $region36: #{tpu_custom_call.1} parent=11 // pred_fallthru
          _
      $region12: #{tpu_custom_call.1} parent=5 // pred_fallthru
        _
      %p251 = scmp.lt.s32.totalorder %s20, 2
      // Predicated region
      $region37: #{tpu_custom_call.1} parent=5 // pred_check
        %p252 = pneg %p251
      $region38: #{tpu_custom_call.1} parent=5 // pred_check_branch
        %254 = sbr.rel (%p252) target = $region40
      $region39: #{tpu_custom_call.1} parent=5 // pred_region
        // Predicated region
        $region41: #{tpu_custom_call.1} parent=39 // pred_check
          %p255 = pneg %p40
        $region42: #{tpu_custom_call.1} parent=39 // pred_check_branch
          %257 = sbr.rel (%p255) target = $region44
        $region43: #{tpu_custom_call.1} parent=39 // pred_region
          %s258 = sand.u32 %s30, 1
          %s259 = scalar_lea.sflag [#allocation3], %s258
          %s260 = sand.u32 %s30, 1
          %s261 = smul.addr %s260, 256
          %s262 = scalar_lea.vmem [#allocation2], %s261
          %s263 = smul.u32 32, %s20
          %s265 = ssub.s32 4096, 4096
          %266 = vsyncadd %s259, %s265
          %s267 = smul.addr %s263, 128
          %s268 = scalar_lea.hbm %s0, %s267
          %s269 = sshll.u32 %s262, 4
          %s270 = int_to_ptr.vmem [resolvable:$true] %s269
          %275 = dma.hbm_to_vmem [thread:$0]  %s268, 4096, %s270, %s259, 128, 128, 8
        $region44: #{tpu_custom_call.1} parent=39 // pred_fallthru
          _
      $region40: #{tpu_custom_call.1} parent=5 // pred_fallthru
        _
      %p276 = scmp.le.s32.totalorder 1, %s20
      %p277 = scmp.lt.s32.totalorder %s20, 3
      %p278 = pnand %p276, %p277
      %p279 = pneg %p278
      // Predicated region
      $region45: #{tpu_custom_call.1} parent=5 // pred_check
        _
      $region46: #{tpu_custom_call.1} parent=5 // pred_check_branch
        %281 = sbr.rel (%p278) target = $region48
      $region47: #{tpu_custom_call.1} parent=5 // pred_region
        %s282 = ssub.s32 %s20, 1
        %s283 = sand.u32 %s33, 1
        %s284 = scalar_lea.sflag [#allocation3], %s283
        %s285 = sand.u32 %s33, 1
        %s286 = smul.addr %s285, 256
        %s287 = scalar_lea.vmem [#allocation2], %s286
        // Predicated region
        $region49: #{tpu_custom_call.1} parent=47 // pred_check
          %p288 = pneg %p46
        $region50: #{tpu_custom_call.1} parent=47 // pred_check_branch
          %290 = sbr.rel (%p288) target = $region52
        $region51: #{tpu_custom_call.1} parent=47 // pred_region
          %291 = dma.done %s284, 4096
        $region52: #{tpu_custom_call.1} parent=47 // pred_fallthru
          _
        // Predicated region
        $region53: #{tpu_custom_call.1} parent=47 // pred_check
          %p292 = pneg %p67
        $region54: #{tpu_custom_call.1} parent=47 // pred_check_branch
          %294 = sbr.rel (%p292) target = $region56
        $region55: #{tpu_custom_call.1} parent=47 // pred_region
          %295 = dma.done [#allocation6], 1024
        $region56: #{tpu_custom_call.1} parent=47 // pred_fallthru
          _
        // Predicated region
        $region57: #{tpu_custom_call.1} parent=47 // pred_check
          %p296 = pneg %p109
        $region58: #{tpu_custom_call.1} parent=47 // pred_check_branch
          %298 = sbr.rel (%p296) target = $region60
        $region59: #{tpu_custom_call.1} parent=47 // pred_region
          %299 = dma.done [#allocation6], 1024
        $region60: #{tpu_custom_call.1} parent=47 // pred_fallthru
          _
        %s300 = sand.u32 %s33, 1
        %s301 = scalar_lea.sflag [#allocation3], %s300
        %s302 = sand.u32 %s33, 1
        %s303 = smul.addr %s302, 256
        %s304 = scalar_lea.vmem [#allocation2], %s303
        %p305 = pneg %p46
        %p306 = pneg %p43
        %p307 = pneg %p67
        %p308 = pneg %p64
        %p309 = pneg %p88
        %p310 = pneg %p85
        %p311 = pneg %p109
        %p312 = pneg %p106
        %p313 = pneg %p130
        %p314 = pneg %p127
        %p315 = pneg %p151
        %p316 = pneg %p148
        %p317 = pneg %p172
        %p318 = pneg %p169
        %p319 = pneg %p198
        %p320 = pneg %p195
        %s321 = sand.u32 %s185, 1
        %s322 = scalar_lea.sflag [#allocation4], %s321
        %s323 = sand.u32 %s185, 1
        %s324 = smul.addr %s323, 256
        %s325 = scalar_lea.vmem [#allocation8], %s324
        %s326 = smul.u32 32, %s25
        %s327 = smul.u32 32, %s25
        %v329 = vld [vmem:[%s287] sm:$0xff]
        %v330 = vld [vmem:[%s287 + $0x8] sm:$0xff]
        %v331 = vld [vmem:[%s287 + $0x10] sm:$0xff]
        %v332 = vld [vmem:[%s287 + $0x18] sm:$0xff]
        %v333 = vld [vmem:[%s287 + $0x20] sm:$0xff]
        %v334 = vld [vmem:[%s287 + $0x28] sm:$0xff]
        %v335 = vld [vmem:[%s287 + $0x30] sm:$0xff]
        %v336 = vld [vmem:[%s287 + $0x38] sm:$0xff]
        %v337 = vld [vmem:[%s287 + $0x40] sm:$0xff]
        %v338 = vld [vmem:[%s287 + $0x48] sm:$0xff]
        %v339 = vld [vmem:[%s287 + $0x50] sm:$0xff]
        %v340 = vld [vmem:[%s287 + $0x58] sm:$0xff]
        %v341 = vld [vmem:[%s287 + $0x60] sm:$0xff]
        %v342 = vld [vmem:[%s287 + $0x68] sm:$0xff]
        %v343 = vld [vmem:[%s287 + $0x70] sm:$0xff]
        %v344 = vld [vmem:[%s287 + $0x78] sm:$0xff]
        %v345 = vld [vmem:[%s287 + $0x80] sm:$0xff]
        %v346 = vld [vmem:[%s287 + $0x88] sm:$0xff]
        %v347 = vld [vmem:[%s287 + $0x90] sm:$0xff]
        %v348 = vld [vmem:[%s287 + $0x98] sm:$0xff]
        %v349 = vld [vmem:[%s287 + $0xa0] sm:$0xff]
        %v350 = vld [vmem:[%s287 + $0xa8] sm:$0xff]
        %v351 = vld [vmem:[%s287 + $0xb0] sm:$0xff]
        %v352 = vld [vmem:[%s287 + $0xb8] sm:$0xff]
        %v353 = vld [vmem:[%s287 + $0xc0] sm:$0xff]
        %v354 = vld [vmem:[%s287 + $0xc8] sm:$0xff]
        %v355 = vld [vmem:[%s287 + $0xd0] sm:$0xff]
        %v356 = vld [vmem:[%s287 + $0xd8] sm:$0xff]
        %v357 = vld [vmem:[%s287 + $0xe0] sm:$0xff]
        %v358 = vld [vmem:[%s287 + $0xe8] sm:$0xff]
        %v359 = vld [vmem:[%s287 + $0xf0] sm:$0xff]
        %v360 = vld [vmem:[%s287 + $0xf8] sm:$0xff]
        %v361 = vpack.c.bf16 %v330, %v329
        %v362 = vpack.c.bf16 %v332, %v331
        %v363 = vpack.c.bf16 %v334, %v333
        %v364 = vpack.c.bf16 %v336, %v335
        %v365 = vpack.c.bf16 %v338, %v337
        %v366 = vpack.c.bf16 %v340, %v339
        %v367 = vpack.c.bf16 %v342, %v341
        %v368 = vpack.c.bf16 %v344, %v343
        %v369 = vpack.c.bf16 %v346, %v345
        %v370 = vpack.c.bf16 %v348, %v347
        %v371 = vpack.c.bf16 %v350, %v349
        %v372 = vpack.c.bf16 %v352, %v351
        %v373 = vpack.c.bf16 %v354, %v353
        %v374 = vpack.c.bf16 %v356, %v355
        %v375 = vpack.c.bf16 %v358, %v357
        %v376 = vpack.c.bf16 %v360, %v359
        %v377 = vld [vmem:[#allocation5] sm:$0xf]
        %v378 = vld [vmem:[#allocation5 + $0x4] sm:$0xf]
        %v379 = vld [vmem:[#allocation5 + $0x8] sm:$0xf]
        %v380 = vld [vmem:[#allocation5 + $0xc] sm:$0xf]
        %v381 = vld [vmem:[#allocation5 + $0x10] sm:$0xf]
        %v382 = vld [vmem:[#allocation5 + $0x14] sm:$0xf]
        %v383 = vld [vmem:[#allocation5 + $0x18] sm:$0xf]
        %v384 = vld [vmem:[#allocation5 + $0x1c] sm:$0xf]
        %v385 = vld [vmem:[#allocation5 + $0x20] sm:$0xf]
        %v386 = vld [vmem:[#allocation5 + $0x24] sm:$0xf]
        %v387 = vld [vmem:[#allocation5 + $0x28] sm:$0xf]
        %v388 = vld [vmem:[#allocation5 + $0x2c] sm:$0xf]
        %v389 = vld [vmem:[#allocation5 + $0x30] sm:$0xf]
        %v390 = vld [vmem:[#allocation5 + $0x34] sm:$0xf]
        %v391 = vld [vmem:[#allocation5 + $0x38] sm:$0xf]
        %v392 = vld [vmem:[#allocation5 + $0x3c] sm:$0xf]
        %v393 = vld [vmem:[%s2] sm:$0x1]
        %v395 = vlaneseq
        %v396 = vshrl.u32 %v395, 7
        %v397 = vsub.s32 0, %v396
        %v398 = vrot.slane %v393, %v397
        %v416 = vunpack.c.l.b16 %v377
        %v417 = vunpack.c.l.b16 %v378
        %v418 = vunpack.c.l.b16 %v379
        %v419 = vunpack.c.l.b16 %v380
        %v420 = vunpack.c.l.b16 %v381
        %v421 = vunpack.c.l.b16 %v382
        %v422 = vunpack.c.l.b16 %v383
        %v423 = vunpack.c.l.b16 %v384
        %v424 = vunpack.c.l.b16 %v385
        %v425 = vunpack.c.l.b16 %v386
        %v426 = vunpack.c.l.b16 %v387
        %v427 = vunpack.c.l.b16 %v388
        %v428 = vunpack.c.l.b16 %v389
        %v429 = vunpack.c.l.b16 %v390
        %v430 = vunpack.c.l.b16 %v391
        %v431 = vunpack.c.l.b16 %v392
        %v432 = vpack.c.b16 %v417, %v416
        %v433 = vpack.c.b16 %v419, %v418
        %v434 = vpack.c.b16 %v421, %v420
        %v435 = vpack.c.b16 %v423, %v422
        %v436 = vpack.c.b16 %v425, %v424
        %v437 = vpack.c.b16 %v427, %v426
        %v438 = vpack.c.b16 %v429, %v428
        %v439 = vpack.c.b16 %v431, %v430
        %448 = vmatprep.subr.bf16.mxu0 0
        %449 = vmatpush1.bf16.msra.mxu0 %v439
        %450 = vmatprep.subr.bf16.mxu0 0
        %451 = vmatpush1.bf16.msra.mxu0 %v438
        %452 = vmatprep.subr.bf16.mxu0 0
        %453 = vmatpush1.bf16.msra.mxu0 %v437
        %454 = vmatprep.subr.bf16.mxu0 0
        %455 = vmatpush1.bf16.msra.mxu0 %v436
        %456 = vmatprep.subr.bf16.mxu0 0
        %457 = vmatpush1.bf16.msra.mxu0 %v435
        %458 = vmatprep.subr.bf16.mxu0 0
        %459 = vmatpush1.bf16.msra.mxu0 %v434
        %460 = vmatprep.subr.bf16.mxu0 0
        %461 = vmatpush1.bf16.msra.mxu0 %v433
        %462 = vmatprep.subr.bf16.mxu0 0
        %463 = vmatpush1.bf16.msra.mxu0 %v432
        %464 = vmatprep.subr.bf16.mxu0 0
        %465 = vmatpush2.bf16.msra.mxu0 0
        %466 = vmatprep.subr.bf16.mxu0 0
        %467 = vmatpush2.bf16.msra.mxu0 0
        %468 = vmatprep.subr.bf16.mxu0 0
        %469 = vmatpush2.bf16.msra.mxu0 0
        %470 = vmatprep.subr.bf16.mxu0 0
        %471 = vmatpush2.bf16.msra.mxu0 0
        %472 = vmatprep.subr.bf16.mxu0 0
        %473 = vmatpush2.bf16.msra.mxu0 0
        %474 = vmatprep.subr.bf16.mxu0 0
        %475 = vmatpush2.bf16.msra.mxu0 0
        %476 = vmatprep.subr.bf16.mxu0 0
        %477 = vmatpush2.bf16.msra.mxu0 0
        %478 = vmatprep.subr.bf16.mxu0 0
        %479 = vmatpush2.bf16.msra.mxu0 0
        %480 = vmatprep.mubr.bf16.mxu0 0
        %481 = vmatmul.mubr.bf16.gmra.mxu0 %v361
        %v482 = vpop.f32.mrf.mxu0
        %v483 = vadd.f32 %v398, %v482
        %v484 = vpop.f32.mrf.mxu0
        %v485 = vpop.f32.mrf.mxu0
        %v486 = vadd.f32 %v398, %v485
        %v487 = vpop.f32.mrf.mxu0
        %488 = vmatprep.mubr.bf16.mxu0 0
        %489 = vmatmul.mubr.bf16.gmra.mxu0 %v362
        %v490 = vpop.f32.mrf.mxu0
        %v491 = vadd.f32 %v398, %v490
        %v492 = vpop.f32.mrf.mxu0
        %v493 = vpop.f32.mrf.mxu0
        %v494 = vadd.f32 %v398, %v493
        %v495 = vpop.f32.mrf.mxu0
        %496 = vmatprep.mubr.bf16.mxu0 0
        %497 = vmatmul.mubr.bf16.gmra.mxu0 %v363
        %v498 = vpop.f32.mrf.mxu0
        %v499 = vadd.f32 %v398, %v498
        %v500 = vpop.f32.mrf.mxu0
        %v501 = vpop.f32.mrf.mxu0
        %v502 = vadd.f32 %v398, %v501
        %v503 = vpop.f32.mrf.mxu0
        %504 = vmatprep.mubr.bf16.mxu0 0
        %505 = vmatmul.mubr.bf16.gmra.mxu0 %v364
        %v506 = vpop.f32.mrf.mxu0
        %v507 = vadd.f32 %v398, %v506
        %v508 = vpop.f32.mrf.mxu0
        %v509 = vpop.f32.mrf.mxu0
        %v510 = vadd.f32 %v398, %v509
        %v511 = vpop.f32.mrf.mxu0
        %512 = vmatprep.mubr.bf16.mxu0 0
        %513 = vmatmul.mubr.bf16.gmra.mxu0 %v365
        %v514 = vpop.f32.mrf.mxu0
        %v515 = vadd.f32 %v398, %v514
        %v516 = vpop.f32.mrf.mxu0
        %v517 = vpop.f32.mrf.mxu0
        %v518 = vadd.f32 %v398, %v517
        %v519 = vpop.f32.mrf.mxu0
        %520 = vmatprep.mubr.bf16.mxu0 0
        %521 = vmatmul.mubr.bf16.gmra.mxu0 %v366
        %v522 = vpop.f32.mrf.mxu0
        %v523 = vadd.f32 %v398, %v522
        %v524 = vpop.f32.mrf.mxu0
        %v525 = vpop.f32.mrf.mxu0
        %v526 = vadd.f32 %v398, %v525
        %v527 = vpop.f32.mrf.mxu0
        %528 = vmatprep.mubr.bf16.mxu0 0
        %529 = vmatmul.mubr.bf16.gmra.mxu0 %v367
        %v530 = vpop.f32.mrf.mxu0
        %v531 = vadd.f32 %v398, %v530
        %v532 = vpop.f32.mrf.mxu0
        %v533 = vpop.f32.mrf.mxu0
        %v534 = vadd.f32 %v398, %v533
        %v535 = vpop.f32.mrf.mxu0
        %536 = vmatprep.mubr.bf16.mxu0 0
        %537 = vmatmul.mubr.bf16.gmra.mxu0 %v368
        %v538 = vpop.f32.mrf.mxu0
        %v539 = vadd.f32 %v398, %v538
        %v540 = vpop.f32.mrf.mxu0
        %v541 = vpop.f32.mrf.mxu0
        %v542 = vadd.f32 %v398, %v541
        %v543 = vpop.f32.mrf.mxu0
        %544 = vmatprep.mubr.bf16.mxu0 0
        %545 = vmatmul.mubr.bf16.gmra.mxu0 %v369
        %v546 = vpop.f32.mrf.mxu0
        %v547 = vadd.f32 %v398, %v546
        %v548 = vpop.f32.mrf.mxu0
        %v549 = vpop.f32.mrf.mxu0
        %v550 = vadd.f32 %v398, %v549
        %v551 = vpop.f32.mrf.mxu0
        %552 = vmatprep.mubr.bf16.mxu0 0
        %553 = vmatmul.mubr.bf16.gmra.mxu0 %v370
        %v554 = vpop.f32.mrf.mxu0
        %v555 = vadd.f32 %v398, %v554
        %v556 = vpop.f32.mrf.mxu0
        %v557 = vpop.f32.mrf.mxu0
        %v558 = vadd.f32 %v398, %v557
        %v559 = vpop.f32.mrf.mxu0
        %560 = vmatprep.mubr.bf16.mxu0 0
        %561 = vmatmul.mubr.bf16.gmra.mxu0 %v371
        %v562 = vpop.f32.mrf.mxu0
        %v563 = vadd.f32 %v398, %v562
        %v564 = vpop.f32.mrf.mxu0
        %v565 = vpop.f32.mrf.mxu0
        %v566 = vadd.f32 %v398, %v565
        %v567 = vpop.f32.mrf.mxu0
        %568 = vmatprep.mubr.bf16.mxu0 0
        %569 = vmatmul.mubr.bf16.gmra.mxu0 %v372
        %v570 = vpop.f32.mrf.mxu0
        %v571 = vadd.f32 %v398, %v570
        %v572 = vpop.f32.mrf.mxu0
        %v573 = vpop.f32.mrf.mxu0
        %v574 = vadd.f32 %v398, %v573
        %v575 = vpop.f32.mrf.mxu0
        %576 = vmatprep.mubr.bf16.mxu0 0
        %577 = vmatmul.mubr.bf16.gmra.mxu0 %v373
        %v578 = vpop.f32.mrf.mxu0
        %v579 = vadd.f32 %v398, %v578
        %v580 = vpop.f32.mrf.mxu0
        %v581 = vpop.f32.mrf.mxu0
        %v582 = vadd.f32 %v398, %v581
        %v583 = vpop.f32.mrf.mxu0
        %584 = vmatprep.mubr.bf16.mxu0 0
        %585 = vmatmul.mubr.bf16.gmra.mxu0 %v374
        %v586 = vpop.f32.mrf.mxu0
        %v587 = vadd.f32 %v398, %v586
        %v588 = vpop.f32.mrf.mxu0
        %v589 = vpop.f32.mrf.mxu0
        %v590 = vadd.f32 %v398, %v589
        %v591 = vpop.f32.mrf.mxu0
        %592 = vmatprep.mubr.bf16.mxu0 0
        %593 = vmatmul.mubr.bf16.gmra.mxu0 %v375
        %v594 = vpop.f32.mrf.mxu0
        %v595 = vadd.f32 %v398, %v594
        %v596 = vpop.f32.mrf.mxu0
        %v597 = vpop.f32.mrf.mxu0
        %v598 = vadd.f32 %v398, %v597
        %v599 = vpop.f32.mrf.mxu0
        %600 = vmatprep.mubr.bf16.mxu0 0
        %601 = vmatmul.mubr.bf16.gmra.mxu0 %v376
        %v602 = vpop.f32.mrf.mxu0
        %v603 = vadd.f32 %v398, %v602
        %v604 = vpop.f32.mrf.mxu0
        %v605 = vpop.f32.mrf.mxu0
        %v606 = vadd.f32 %v398, %v605
        %v607 = vpop.f32.mrf.mxu0
        %608 = vdwg.mxu0
        %v609 = vmax.f32 %v483, 0.0
        %v610 = vmax.f32 %v486, 0.0
        %v611 = vmax.f32 %v491, 0.0
        %v612 = vmax.f32 %v494, 0.0
        %v613 = vmax.f32 %v499, 0.0
        %v614 = vmax.f32 %v502, 0.0
        %v615 = vmax.f32 %v507, 0.0
        %v616 = vmax.f32 %v510, 0.0
        %v617 = vmax.f32 %v515, 0.0
        %v618 = vmax.f32 %v518, 0.0
        %v619 = vmax.f32 %v523, 0.0
        %v620 = vmax.f32 %v526, 0.0
        %v621 = vmax.f32 %v531, 0.0
        %v622 = vmax.f32 %v534, 0.0
        %v623 = vmax.f32 %v539, 0.0
        %v624 = vmax.f32 %v542, 0.0
        %v625 = vmax.f32 %v547, 0.0
        %v626 = vmax.f32 %v550, 0.0
        %v627 = vmax.f32 %v555, 0.0
        %v628 = vmax.f32 %v558, 0.0
        %v629 = vmax.f32 %v563, 0.0
        %v630 = vmax.f32 %v566, 0.0
        %v631 = vmax.f32 %v571, 0.0
        %v632 = vmax.f32 %v574, 0.0
        %v633 = vmax.f32 %v579, 0.0
        %v634 = vmax.f32 %v582, 0.0
        %v635 = vmax.f32 %v587, 0.0
        %v636 = vmax.f32 %v590, 0.0
        %v637 = vmax.f32 %v595, 0.0
        %v638 = vmax.f32 %v598, 0.0
        %v639 = vmax.f32 %v603, 0.0
        %v640 = vmax.f32 %v606, 0.0
        %v641 = vpack.c.bf16 %v610, %v609
        %v642 = vpack.c.bf16 %v612, %v611
        %v643 = vpack.c.bf16 %v614, %v613
        %v644 = vpack.c.bf16 %v616, %v615
        %v645 = vpack.c.bf16 %v618, %v617
        %v646 = vpack.c.bf16 %v620, %v619
        %v647 = vpack.c.bf16 %v622, %v621
        %v648 = vpack.c.bf16 %v624, %v623
        %v649 = vpack.c.bf16 %v626, %v625
        %v650 = vpack.c.bf16 %v628, %v627
        %v651 = vpack.c.bf16 %v630, %v629
        %v652 = vpack.c.bf16 %v632, %v631
        %v653 = vpack.c.bf16 %v634, %v633
        %v654 = vpack.c.bf16 %v636, %v635
        %v655 = vpack.c.bf16 %v638, %v637
        %v656 = vpack.c.bf16 %v640, %v639
        %v657 = vld [vmem:[#allocation7] sm:$0xf]
        %v658 = vld [vmem:[#allocation7 + $0x4] sm:$0xf]
        %v659 = vld [vmem:[#allocation7 + $0x8] sm:$0xf]
        %v660 = vld [vmem:[#allocation7 + $0xc] sm:$0xf]
        %v661 = vld [vmem:[#allocation7 + $0x10] sm:$0xf]
        %v662 = vld [vmem:[#allocation7 + $0x14] sm:$0xf]
        %v663 = vld [vmem:[#allocation7 + $0x18] sm:$0xf]
        %v664 = vld [vmem:[#allocation7 + $0x1c] sm:$0xf]
        %v665 = vld [vmem:[#allocation7 + $0x20] sm:$0xf]
        %v666 = vld [vmem:[#allocation7 + $0x24] sm:$0xf]
        %v667 = vld [vmem:[#allocation7 + $0x28] sm:$0xf]
        %v668 = vld [vmem:[#allocation7 + $0x2c] sm:$0xf]
        %v669 = vld [vmem:[#allocation7 + $0x30] sm:$0xf]
        %v670 = vld [vmem:[#allocation7 + $0x34] sm:$0xf]
        %v671 = vld [vmem:[#allocation7 + $0x38] sm:$0xf]
        %v672 = vld [vmem:[#allocation7 + $0x3c] sm:$0xf]
        %v673 = vld [vmem:[%s4] sm:$0x1]
        %v675 = vlaneseq
        %v676 = vshrl.u32 %v675, 7
        %v677 = vsub.s32 0, %v676
        %v678 = vrot.slane %v673, %v677
        %v696 = vunpack.c.l.b16 %v657
        %v697 = vunpack.c.l.b16 %v658
        %v698 = vunpack.c.l.b16 %v659
        %v699 = vunpack.c.l.b16 %v660
        %v700 = vunpack.c.l.b16 %v661
        %v701 = vunpack.c.l.b16 %v662
        %v702 = vunpack.c.l.b16 %v663
        %v703 = vunpack.c.l.b16 %v664
        %v704 = vunpack.c.l.b16 %v665
        %v705 = vunpack.c.l.b16 %v666
        %v706 = vunpack.c.l.b16 %v667
        %v707 = vunpack.c.l.b16 %v668
        %v708 = vunpack.c.l.b16 %v669
        %v709 = vunpack.c.l.b16 %v670
        %v710 = vunpack.c.l.b16 %v671
        %v711 = vunpack.c.l.b16 %v672
        %v712 = vpack.c.b16 %v697, %v696
        %v713 = vpack.c.b16 %v699, %v698
        %v714 = vpack.c.b16 %v701, %v700
        %v715 = vpack.c.b16 %v703, %v702
        %v716 = vpack.c.b16 %v705, %v704
        %v717 = vpack.c.b16 %v707, %v706
        %v718 = vpack.c.b16 %v709, %v708
        %v719 = vpack.c.b16 %v711, %v710
        %728 = vmatprep.subr.bf16.mxu0 0
        %729 = vmatpush1.bf16.msra.mxu0 %v719
        %730 = vmatprep.subr.bf16.mxu0 0
        %731 = vmatpush1.bf16.msra.mxu0 %v718
        %732 = vmatprep.subr.bf16.mxu0 0
        %733 = vmatpush1.bf16.msra.mxu0 %v717
        %734 = vmatprep.subr.bf16.mxu0 0
        %735 = vmatpush1.bf16.msra.mxu0 %v716
        %736 = vmatprep.subr.bf16.mxu0 0
        %737 = vmatpush1.bf16.msra.mxu0 %v715
        %738 = vmatprep.subr.bf16.mxu0 0
        %739 = vmatpush1.bf16.msra.mxu0 %v714
        %740 = vmatprep.subr.bf16.mxu0 0
        %741 = vmatpush1.bf16.msra.mxu0 %v713
        %742 = vmatprep.subr.bf16.mxu0 0
        %743 = vmatpush1.bf16.msra.mxu0 %v712
        %744 = vmatprep.subr.bf16.mxu0 0
        %745 = vmatpush2.bf16.msra.mxu0 0
        %746 = vmatprep.subr.bf16.mxu0 0
        %747 = vmatpush2.bf16.msra.mxu0 0
        %748 = vmatprep.subr.bf16.mxu0 0
        %749 = vmatpush2.bf16.msra.mxu0 0
        %750 = vmatprep.subr.bf16.mxu0 0
        %751 = vmatpush2.bf16.msra.mxu0 0
        %752 = vmatprep.subr.bf16.mxu0 0
        %753 = vmatpush2.bf16.msra.mxu0 0
        %754 = vmatprep.subr.bf16.mxu0 0
        %755 = vmatpush2.bf16.msra.mxu0 0
        %756 = vmatprep.subr.bf16.mxu0 0
        %757 = vmatpush2.bf16.msra.mxu0 0
        %758 = vmatprep.subr.bf16.mxu0 0
        %759 = vmatpush2.bf16.msra.mxu0 0
        %760 = vmatprep.mubr.bf16.mxu0 0
        %761 = vmatmul.mubr.bf16.gmra.mxu0 %v641
        %v762 = vpop.f32.mrf.mxu0
        %v763 = vadd.f32 %v678, %v762
        %v764 = vpop.f32.mrf.mxu0
        %v765 = vpop.f32.mrf.mxu0
        %v766 = vadd.f32 %v678, %v765
        %v767 = vpop.f32.mrf.mxu0
        %768 = vmatprep.mubr.bf16.mxu0 0
        %769 = vmatmul.mubr.bf16.gmra.mxu0 %v642
        %v770 = vpop.f32.mrf.mxu0
        %v771 = vadd.f32 %v678, %v770
        %v772 = vpop.f32.mrf.mxu0
        %v773 = vpop.f32.mrf.mxu0
        %v774 = vadd.f32 %v678, %v773
        %v775 = vpop.f32.mrf.mxu0
        %776 = vmatprep.mubr.bf16.mxu0 0
        %777 = vmatmul.mubr.bf16.gmra.mxu0 %v643
        %v778 = vpop.f32.mrf.mxu0
        %v779 = vadd.f32 %v678, %v778
        %v780 = vpop.f32.mrf.mxu0
        %v781 = vpop.f32.mrf.mxu0
        %v782 = vadd.f32 %v678, %v781
        %v783 = vpop.f32.mrf.mxu0
        %784 = vmatprep.mubr.bf16.mxu0 0
        %785 = vmatmul.mubr.bf16.gmra.mxu0 %v644
        %v786 = vpop.f32.mrf.mxu0
        %v787 = vadd.f32 %v678, %v786
        %v788 = vpop.f32.mrf.mxu0
        %v789 = vpop.f32.mrf.mxu0
        %v790 = vadd.f32 %v678, %v789
        %v791 = vpop.f32.mrf.mxu0
        %792 = vmatprep.mubr.bf16.mxu0 0
        %793 = vmatmul.mubr.bf16.gmra.mxu0 %v645
        %v794 = vpop.f32.mrf.mxu0
        %v795 = vadd.f32 %v678, %v794
        %v796 = vpop.f32.mrf.mxu0
        %v797 = vpop.f32.mrf.mxu0
        %v798 = vadd.f32 %v678, %v797
        %v799 = vpop.f32.mrf.mxu0
        %800 = vmatprep.mubr.bf16.mxu0 0
        %801 = vmatmul.mubr.bf16.gmra.mxu0 %v646
        %v802 = vpop.f32.mrf.mxu0
        %v803 = vadd.f32 %v678, %v802
        %v804 = vpop.f32.mrf.mxu0
        %v805 = vpop.f32.mrf.mxu0
        %v806 = vadd.f32 %v678, %v805
        %v807 = vpop.f32.mrf.mxu0
        %808 = vmatprep.mubr.bf16.mxu0 0
        %809 = vmatmul.mubr.bf16.gmra.mxu0 %v647
        %v810 = vpop.f32.mrf.mxu0
        %v811 = vadd.f32 %v678, %v810
        %v812 = vpop.f32.mrf.mxu0
        %v813 = vpop.f32.mrf.mxu0
        %v814 = vadd.f32 %v678, %v813
        %v815 = vpop.f32.mrf.mxu0
        %816 = vmatprep.mubr.bf16.mxu0 0
        %817 = vmatmul.mubr.bf16.gmra.mxu0 %v648
        %v818 = vpop.f32.mrf.mxu0
        %v819 = vadd.f32 %v678, %v818
        %v820 = vpop.f32.mrf.mxu0
        %v821 = vpop.f32.mrf.mxu0
        %v822 = vadd.f32 %v678, %v821
        %v823 = vpop.f32.mrf.mxu0
        %824 = vmatprep.mubr.bf16.mxu0 0
        %825 = vmatmul.mubr.bf16.gmra.mxu0 %v649
        %v826 = vpop.f32.mrf.mxu0
        %v827 = vadd.f32 %v678, %v826
        %v828 = vpop.f32.mrf.mxu0
        %v829 = vpop.f32.mrf.mxu0
        %v830 = vadd.f32 %v678, %v829
        %v831 = vpop.f32.mrf.mxu0
        %832 = vmatprep.mubr.bf16.mxu0 0
        %833 = vmatmul.mubr.bf16.gmra.mxu0 %v650
        %v834 = vpop.f32.mrf.mxu0
        %v835 = vadd.f32 %v678, %v834
        %v836 = vpop.f32.mrf.mxu0
        %v837 = vpop.f32.mrf.mxu0
        %v838 = vadd.f32 %v678, %v837
        %v839 = vpop.f32.mrf.mxu0
        %840 = vmatprep.mubr.bf16.mxu0 0
        %841 = vmatmul.mubr.bf16.gmra.mxu0 %v651
        %v842 = vpop.f32.mrf.mxu0
        %v843 = vadd.f32 %v678, %v842
        %v844 = vpop.f32.mrf.mxu0
        %v845 = vpop.f32.mrf.mxu0
        %v846 = vadd.f32 %v678, %v845
        %v847 = vpop.f32.mrf.mxu0
        %848 = vmatprep.mubr.bf16.mxu0 0
        %849 = vmatmul.mubr.bf16.gmra.mxu0 %v652
        %v850 = vpop.f32.mrf.mxu0
        %v851 = vadd.f32 %v678, %v850
        %v852 = vpop.f32.mrf.mxu0
        %v853 = vpop.f32.mrf.mxu0
        %v854 = vadd.f32 %v678, %v853
        %v855 = vpop.f32.mrf.mxu0
        %856 = vmatprep.mubr.bf16.mxu0 0
        %857 = vmatmul.mubr.bf16.gmra.mxu0 %v653
        %v858 = vpop.f32.mrf.mxu0
        %v859 = vadd.f32 %v678, %v858
        %v860 = vpop.f32.mrf.mxu0
        %v861 = vpop.f32.mrf.mxu0
        %v862 = vadd.f32 %v678, %v861
        %v863 = vpop.f32.mrf.mxu0
        %864 = vmatprep.mubr.bf16.mxu0 0
        %865 = vmatmul.mubr.bf16.gmra.mxu0 %v654
        %v866 = vpop.f32.mrf.mxu0
        %v867 = vadd.f32 %v678, %v866
        %v868 = vpop.f32.mrf.mxu0
        %v869 = vpop.f32.mrf.mxu0
        %v870 = vadd.f32 %v678, %v869
        %v871 = vpop.f32.mrf.mxu0
        %872 = vmatprep.mubr.bf16.mxu0 0
        %873 = vmatmul.mubr.bf16.gmra.mxu0 %v655
        %v874 = vpop.f32.mrf.mxu0
        %v875 = vadd.f32 %v678, %v874
        %v876 = vpop.f32.mrf.mxu0
        %v877 = vpop.f32.mrf.mxu0
        %v878 = vadd.f32 %v678, %v877
        %v879 = vpop.f32.mrf.mxu0
        %880 = vmatprep.mubr.bf16.mxu0 0
        %881 = vmatmul.mubr.bf16.gmra.mxu0 %v656
        %v882 = vpop.f32.mrf.mxu0
        %v883 = vadd.f32 %v678, %v882
        %v884 = vpop.f32.mrf.mxu0
        %v885 = vpop.f32.mrf.mxu0
        %v886 = vadd.f32 %v678, %v885
        %v887 = vpop.f32.mrf.mxu0
        %888 = vdwg.mxu0
        %v889 = vadd.f32 %v763, %v329
        %v890 = vadd.f32 %v766, %v330
        %v891 = vadd.f32 %v771, %v331
        %v892 = vadd.f32 %v774, %v332
        %v893 = vadd.f32 %v779, %v333
        %v894 = vadd.f32 %v782, %v334
        %v895 = vadd.f32 %v787, %v335
        %v896 = vadd.f32 %v790, %v336
        %v897 = vadd.f32 %v795, %v337
        %v898 = vadd.f32 %v798, %v338
        %v899 = vadd.f32 %v803, %v339
        %v900 = vadd.f32 %v806, %v340
        %v901 = vadd.f32 %v811, %v341
        %v902 = vadd.f32 %v814, %v342
        %v903 = vadd.f32 %v819, %v343
        %v904 = vadd.f32 %v822, %v344
        %v905 = vadd.f32 %v827, %v345
        %v906 = vadd.f32 %v830, %v346
        %v907 = vadd.f32 %v835, %v347
        %v908 = vadd.f32 %v838, %v348
        %v909 = vadd.f32 %v843, %v349
        %v910 = vadd.f32 %v846, %v350
        %v911 = vadd.f32 %v851, %v351
        %v912 = vadd.f32 %v854, %v352
        %v913 = vadd.f32 %v859, %v353
        %v914 = vadd.f32 %v862, %v354
        %v915 = vadd.f32 %v867, %v355
        %v916 = vadd.f32 %v870, %v356
        %v917 = vadd.f32 %v875, %v357
        %v918 = vadd.f32 %v878, %v358
        %v919 = vadd.f32 %v883, %v359
        %v920 = vadd.f32 %v886, %v360
        %v921 = vlaneseq
        %v922 = vand.u32 %v921, 127
        %vm923 = vcmp.lt.s32.totalorder %v922, 32
        %924 = vadd.xlane.f32.xlu0 %v889
        %v925 = vpop.xlane.xlu0 %924
        %926 = vadd.xlane.f32.xlu0 %v890
        %v927 = vpop.xlane.xlu0 %926
        %928 = vadd.xlane.f32.xlu0 %v891
        %v929 = vpop.xlane.xlu0 %928
        %930 = vadd.xlane.f32.xlu0 %v892
        %v931 = vpop.xlane.xlu0 %930
        %932 = vadd.xlane.f32.xlu0 %v893
        %v933 = vpop.xlane.xlu0 %932
        %934 = vadd.xlane.f32.xlu0 %v894
        %v935 = vpop.xlane.xlu0 %934
        %936 = vadd.xlane.f32.xlu0 %v895
        %v937 = vpop.xlane.xlu0 %936
        %938 = vadd.xlane.f32.xlu0 %v896
        %v939 = vpop.xlane.xlu0 %938
        %940 = vadd.xlane.f32.xlu0 %v897
        %v941 = vpop.xlane.xlu0 %940
        %942 = vadd.xlane.f32.xlu0 %v898
        %v943 = vpop.xlane.xlu0 %942
        %944 = vadd.xlane.f32.xlu0 %v899
        %v945 = vpop.xlane.xlu0 %944
        %946 = vadd.xlane.f32.xlu0 %v900
        %v947 = vpop.xlane.xlu0 %946
        %948 = vadd.xlane.f32.xlu0 %v901
        %v949 = vpop.xlane.xlu0 %948
        %950 = vadd.xlane.f32.xlu0 %v902
        %v951 = vpop.xlane.xlu0 %950
        %952 = vadd.xlane.f32.xlu0 %v903
        %v953 = vpop.xlane.xlu0 %952
        %954 = vadd.xlane.f32.xlu0 %v904
        %v955 = vpop.xlane.xlu0 %954
        %956 = vadd.xlane.f32.xlu0 %v905
        %v957 = vpop.xlane.xlu0 %956
        %958 = vadd.xlane.f32.xlu0 %v906
        %v959 = vpop.xlane.xlu0 %958
        %960 = vadd.xlane.f32.xlu0 %v907
        %v961 = vpop.xlane.xlu0 %960
        %962 = vadd.xlane.f32.xlu0 %v908
        %v963 = vpop.xlane.xlu0 %962
        %964 = vadd.xlane.f32.xlu0 %v909
        %v965 = vpop.xlane.xlu0 %964
        %966 = vadd.xlane.f32.xlu0 %v910
        %v967 = vpop.xlane.xlu0 %966
        %968 = vadd.xlane.f32.xlu0 %v911
        %v969 = vpop.xlane.xlu0 %968
        %970 = vadd.xlane.f32.xlu0 %v912
        %v971 = vpop.xlane.xlu0 %970
        %972 = vadd.xlane.f32.xlu0 %v913
        %v973 = vpop.xlane.xlu0 %972
        %974 = vadd.xlane.f32.xlu0 %v914
        %v975 = vpop.xlane.xlu0 %974
        %976 = vadd.xlane.f32.xlu0 %v915
        %v977 = vpop.xlane.xlu0 %976
        %978 = vadd.xlane.f32.xlu0 %v916
        %v979 = vpop.xlane.xlu0 %978
        %980 = vadd.xlane.f32.xlu0 %v917
        %v981 = vpop.xlane.xlu0 %980
        %982 = vadd.xlane.f32.xlu0 %v918
        %v983 = vpop.xlane.xlu0 %982
        %984 = vadd.xlane.f32.xlu0 %v919
        %v985 = vpop.xlane.xlu0 %984
        %986 = vadd.xlane.f32.xlu0 %v920
        %v987 = vpop.xlane.xlu0 %986
        %v988 = vmul.f32 %v925, 0.03125
        %v989 = vmul.f32 %v927, 0.03125
        %v990 = vmul.f32 %v929, 0.03125
        %v991 = vmul.f32 %v931, 0.03125
        %v992 = vmul.f32 %v933, 0.03125
        %v993 = vmul.f32 %v935, 0.03125
        %v994 = vmul.f32 %v937, 0.03125
        %v995 = vmul.f32 %v939, 0.03125
        %v996 = vmul.f32 %v941, 0.03125
        %v997 = vmul.f32 %v943, 0.03125
        %v998 = vmul.f32 %v945, 0.03125
        %v999 = vmul.f32 %v947, 0.03125
        %v1000 = vmul.f32 %v949, 0.03125
        %v1001 = vmul.f32 %v951, 0.03125
        %v1002 = vmul.f32 %v953, 0.03125
        %v1003 = vmul.f32 %v955, 0.03125
        %v1004 = vmul.f32 %v957, 0.03125
        %v1005 = vmul.f32 %v959, 0.03125
        %v1006 = vmul.f32 %v961, 0.03125
        %v1007 = vmul.f32 %v963, 0.03125
        %v1008 = vmul.f32 %v965, 0.03125
        %v1009 = vmul.f32 %v967, 0.03125
        %v1010 = vmul.f32 %v969, 0.03125
        %v1011 = vmul.f32 %v971, 0.03125
        %v1012 = vmul.f32 %v973, 0.03125
        %v1013 = vmul.f32 %v975, 0.03125
        %v1014 = vmul.f32 %v977, 0.03125
        %v1015 = vmul.f32 %v979, 0.03125
        %v1016 = vmul.f32 %v981, 0.03125
        %v1017 = vmul.f32 %v983, 0.03125
        %v1018 = vmul.f32 %v985, 0.03125
        %v1019 = vmul.f32 %v987, 0.03125
        %v1020 = vsub.f32 %v889, %v988
        %v1021 = vsub.f32 %v890, %v989
        %v1022 = vsub.f32 %v891, %v990
        %v1023 = vsub.f32 %v892, %v991
        %v1024 = vsub.f32 %v893, %v992
        %v1025 = vsub.f32 %v894, %v993
        %v1026 = vsub.f32 %v895, %v994
        %v1027 = vsub.f32 %v896, %v995
        %v1028 = vsub.f32 %v897, %v996
        %v1029 = vsub.f32 %v898, %v997
        %v1030 = vsub.f32 %v899, %v998
        %v1031 = vsub.f32 %v900, %v999
        %v1032 = vsub.f32 %v901, %v1000
        %v1033 = vsub.f32 %v902, %v1001
        %v1034 = vsub.f32 %v903, %v1002
        %v1035 = vsub.f32 %v904, %v1003
        %v1036 = vsub.f32 %v905, %v1004
        %v1037 = vsub.f32 %v906, %v1005
        %v1038 = vsub.f32 %v907, %v1006
        %v1039 = vsub.f32 %v908, %v1007
        %v1040 = vsub.f32 %v909, %v1008
        %v1041 = vsub.f32 %v910, %v1009
        %v1042 = vsub.f32 %v911, %v1010
        %v1043 = vsub.f32 %v912, %v1011
        %v1044 = vsub.f32 %v913, %v1012
        %v1045 = vsub.f32 %v914, %v1013
        %v1046 = vsub.f32 %v915, %v1014
        %v1047 = vsub.f32 %v916, %v1015
        %v1048 = vsub.f32 %v917, %v1016
        %v1049 = vsub.f32 %v918, %v1017
        %v1050 = vsub.f32 %v919, %v1018
        %v1051 = vsub.f32 %v920, %v1019
        %v1052 = vsel %vm923, 1, 0
        %vm1053 = vcmp.eq.s32.totalorder %v1052, 1
        %v1054 = vsel %vm1053, %v1020, 0.0
        %v1055 = vsel %vm1053, %v1021, 0.0
        %v1056 = vsel %vm1053, %v1022, 0.0
        %v1057 = vsel %vm1053, %v1023, 0.0
        %v1058 = vsel %vm1053, %v1024, 0.0
        %v1059 = vsel %vm1053, %v1025, 0.0
        %v1060 = vsel %vm1053, %v1026, 0.0
        %v1061 = vsel %vm1053, %v1027, 0.0
        %v1062 = vsel %vm1053, %v1028, 0.0
        %v1063 = vsel %vm1053, %v1029, 0.0
        %v1064 = vsel %vm1053, %v1030, 0.0
        %v1065 = vsel %vm1053, %v1031, 0.0
        %v1066 = vsel %vm1053, %v1032, 0.0
        %v1067 = vsel %vm1053, %v1033, 0.0
        %v1068 = vsel %vm1053, %v1034, 0.0
        %v1069 = vsel %vm1053, %v1035, 0.0
        %v1070 = vsel %vm1053, %v1036, 0.0
        %v1071 = vsel %vm1053, %v1037, 0.0
        %v1072 = vsel %vm1053, %v1038, 0.0
        %v1073 = vsel %vm1053, %v1039, 0.0
        %v1074 = vsel %vm1053, %v1040, 0.0
        %v1075 = vsel %vm1053, %v1041, 0.0
        %v1076 = vsel %vm1053, %v1042, 0.0
        %v1077 = vsel %vm1053, %v1043, 0.0
        %v1078 = vsel %vm1053, %v1044, 0.0
        %v1079 = vsel %vm1053, %v1045, 0.0
        %v1080 = vsel %vm1053, %v1046, 0.0
        %v1081 = vsel %vm1053, %v1047, 0.0
        %v1082 = vsel %vm1053, %v1048, 0.0
        %v1083 = vsel %vm1053, %v1049, 0.0
        %v1084 = vsel %vm1053, %v1050, 0.0
        %v1085 = vsel %vm1053, %v1051, 0.0
        %v1086 = vmul.f32 %v1054, %v1054
        %v1087 = vmul.f32 %v1055, %v1055
        %v1088 = vmul.f32 %v1056, %v1056
        %v1089 = vmul.f32 %v1057, %v1057
        %v1090 = vmul.f32 %v1058, %v1058
        %v1091 = vmul.f32 %v1059, %v1059
        %v1092 = vmul.f32 %v1060, %v1060
        %v1093 = vmul.f32 %v1061, %v1061
        %v1094 = vmul.f32 %v1062, %v1062
        %v1095 = vmul.f32 %v1063, %v1063
        %v1096 = vmul.f32 %v1064, %v1064
        %v1097 = vmul.f32 %v1065, %v1065
        %v1098 = vmul.f32 %v1066, %v1066
        %v1099 = vmul.f32 %v1067, %v1067
        %v1100 = vmul.f32 %v1068, %v1068
        %v1101 = vmul.f32 %v1069, %v1069
        %v1102 = vmul.f32 %v1070, %v1070
        %v1103 = vmul.f32 %v1071, %v1071
        %v1104 = vmul.f32 %v1072, %v1072
        %v1105 = vmul.f32 %v1073, %v1073
        %v1106 = vmul.f32 %v1074, %v1074
        %v1107 = vmul.f32 %v1075, %v1075
        %v1108 = vmul.f32 %v1076, %v1076
        %v1109 = vmul.f32 %v1077, %v1077
        %v1110 = vmul.f32 %v1078, %v1078
        %v1111 = vmul.f32 %v1079, %v1079
        %v1112 = vmul.f32 %v1080, %v1080
        %v1113 = vmul.f32 %v1081, %v1081
        %v1114 = vmul.f32 %v1082, %v1082
        %v1115 = vmul.f32 %v1083, %v1083
        %v1116 = vmul.f32 %v1084, %v1084
        %v1117 = vmul.f32 %v1085, %v1085
        %1118 = vadd.xlane.f32.xlu0 %v1086
        %v1119 = vpop.xlane.xlu0 %1118
        %1120 = vadd.xlane.f32.xlu0 %v1087
        %v1121 = vpop.xlane.xlu0 %1120
        %1122 = vadd.xlane.f32.xlu0 %v1088
        %v1123 = vpop.xlane.xlu0 %1122
        %1124 = vadd.xlane.f32.xlu0 %v1089
        %v1125 = vpop.xlane.xlu0 %1124
        %1126 = vadd.xlane.f32.xlu0 %v1090
        %v1127 = vpop.xlane.xlu0 %1126
        %1128 = vadd.xlane.f32.xlu0 %v1091
        %v1129 = vpop.xlane.xlu0 %1128
        %1130 = vadd.xlane.f32.xlu0 %v1092
        %v1131 = vpop.xlane.xlu0 %1130
        %1132 = vadd.xlane.f32.xlu0 %v1093
        %v1133 = vpop.xlane.xlu0 %1132
        %1134 = vadd.xlane.f32.xlu0 %v1094
        %v1135 = vpop.xlane.xlu0 %1134
        %1136 = vadd.xlane.f32.xlu0 %v1095
        %v1137 = vpop.xlane.xlu0 %1136
        %1138 = vadd.xlane.f32.xlu0 %v1096
        %v1139 = vpop.xlane.xlu0 %1138
        %1140 = vadd.xlane.f32.xlu0 %v1097
        %v1141 = vpop.xlane.xlu0 %1140
        %1142 = vadd.xlane.f32.xlu0 %v1098
        %v1143 = vpop.xlane.xlu0 %1142
        %1144 = vadd.xlane.f32.xlu0 %v1099
        %v1145 = vpop.xlane.xlu0 %1144
        %1146 = vadd.xlane.f32.xlu0 %v1100
        %v1147 = vpop.xlane.xlu0 %1146
        %1148 = vadd.xlane.f32.xlu0 %v1101
        %v1149 = vpop.xlane.xlu0 %1148
        %1150 = vadd.xlane.f32.xlu0 %v1102
        %v1151 = vpop.xlane.xlu0 %1150
        %1152 = vadd.xlane.f32.xlu0 %v1103
        %v1153 = vpop.xlane.xlu0 %1152
        %1154 = vadd.xlane.f32.xlu0 %v1104
        %v1155 = vpop.xlane.xlu0 %1154
        %1156 = vadd.xlane.f32.xlu0 %v1105
        %v1157 = vpop.xlane.xlu0 %1156
        %1158 = vadd.xlane.f32.xlu0 %v1106
        %v1159 = vpop.xlane.xlu0 %1158
        %1160 = vadd.xlane.f32.xlu0 %v1107
        %v1161 = vpop.xlane.xlu0 %1160
        %1162 = vadd.xlane.f32.xlu0 %v1108
        %v1163 = vpop.xlane.xlu0 %1162
        %1164 = vadd.xlane.f32.xlu0 %v1109
        %v1165 = vpop.xlane.xlu0 %1164
        %1166 = vadd.xlane.f32.xlu0 %v1110
        %v1167 = vpop.xlane.xlu0 %1166
        %1168 = vadd.xlane.f32.xlu0 %v1111
        %v1169 = vpop.xlane.xlu0 %1168
        %1170 = vadd.xlane.f32.xlu0 %v1112
        %v1171 = vpop.xlane.xlu0 %1170
        %1172 = vadd.xlane.f32.xlu0 %v1113
        %v1173 = vpop.xlane.xlu0 %1172
        %1174 = vadd.xlane.f32.xlu0 %v1114
        %v1175 = vpop.xlane.xlu0 %1174
        %1176 = vadd.xlane.f32.xlu0 %v1115
        %v1177 = vpop.xlane.xlu0 %1176
        %1178 = vadd.xlane.f32.xlu0 %v1116
        %v1179 = vpop.xlane.xlu0 %1178
        %1180 = vadd.xlane.f32.xlu0 %v1117
        %v1181 = vpop.xlane.xlu0 %1180
        %v1182 = vmul.f32 %v1119, 0.03125
        %v1183 = vmul.f32 %v1121, 0.03125
        %v1184 = vmul.f32 %v1123, 0.03125
        %v1185 = vmul.f32 %v1125, 0.03125
        %v1186 = vmul.f32 %v1127, 0.03125
        %v1187 = vmul.f32 %v1129, 0.03125
        %v1188 = vmul.f32 %v1131, 0.03125
        %v1189 = vmul.f32 %v1133, 0.03125
        %v1190 = vmul.f32 %v1135, 0.03125
        %v1191 = vmul.f32 %v1137, 0.03125
        %v1192 = vmul.f32 %v1139, 0.03125
        %v1193 = vmul.f32 %v1141, 0.03125
        %v1194 = vmul.f32 %v1143, 0.03125
        %v1195 = vmul.f32 %v1145, 0.03125
        %v1196 = vmul.f32 %v1147, 0.03125
        %v1197 = vmul.f32 %v1149, 0.03125
        %v1198 = vmul.f32 %v1151, 0.03125
        %v1199 = vmul.f32 %v1153, 0.03125
        %v1200 = vmul.f32 %v1155, 0.03125
        %v1201 = vmul.f32 %v1157, 0.03125
        %v1202 = vmul.f32 %v1159, 0.03125
        %v1203 = vmul.f32 %v1161, 0.03125
        %v1204 = vmul.f32 %v1163, 0.03125
        %v1205 = vmul.f32 %v1165, 0.03125
        %v1206 = vmul.f32 %v1167, 0.03125
        %v1207 = vmul.f32 %v1169, 0.03125
        %v1208 = vmul.f32 %v1171, 0.03125
        %v1209 = vmul.f32 %v1173, 0.03125
        %v1210 = vmul.f32 %v1175, 0.03125
        %v1211 = vmul.f32 %v1177, 0.03125
        %v1212 = vmul.f32 %v1179, 0.03125
        %v1213 = vmul.f32 %v1181, 0.03125
        %v1214 = vadd.f32 %v1182, 1e-05
        %v1215 = vadd.f32 %v1183, 1e-05
        %v1216 = vadd.f32 %v1184, 1e-05
        %v1217 = vadd.f32 %v1185, 1e-05
        %v1218 = vadd.f32 %v1186, 1e-05
        %v1219 = vadd.f32 %v1187, 1e-05
        %v1220 = vadd.f32 %v1188, 1e-05
        %v1221 = vadd.f32 %v1189, 1e-05
        %v1222 = vadd.f32 %v1190, 1e-05
        %v1223 = vadd.f32 %v1191, 1e-05
        %v1224 = vadd.f32 %v1192, 1e-05
        %v1225 = vadd.f32 %v1193, 1e-05
        %v1226 = vadd.f32 %v1194, 1e-05
        %v1227 = vadd.f32 %v1195, 1e-05
        %v1228 = vadd.f32 %v1196, 1e-05
        %v1229 = vadd.f32 %v1197, 1e-05
        %v1230 = vadd.f32 %v1198, 1e-05
        %v1231 = vadd.f32 %v1199, 1e-05
        %v1232 = vadd.f32 %v1200, 1e-05
        %v1233 = vadd.f32 %v1201, 1e-05
        %v1234 = vadd.f32 %v1202, 1e-05
        %v1235 = vadd.f32 %v1203, 1e-05
        %v1236 = vadd.f32 %v1204, 1e-05
        %v1237 = vadd.f32 %v1205, 1e-05
        %v1238 = vadd.f32 %v1206, 1e-05
        %v1239 = vadd.f32 %v1207, 1e-05
        %v1240 = vadd.f32 %v1208, 1e-05
        %v1241 = vadd.f32 %v1209, 1e-05
        %v1242 = vadd.f32 %v1210, 1e-05
        %v1243 = vadd.f32 %v1211, 1e-05
        %v1244 = vadd.f32 %v1212, 1e-05
        %v1245 = vadd.f32 %v1213, 1e-05
        %v1246 = vrsqrt.pop %v1214
        %v1247 = vrsqrt.pop %v1215
        %v1248 = vrsqrt.pop %v1216
        %v1249 = vrsqrt.pop %v1217
        %v1250 = vrsqrt.pop %v1218
        %v1251 = vrsqrt.pop %v1219
        %v1252 = vrsqrt.pop %v1220
        %v1253 = vrsqrt.pop %v1221
        %v1254 = vrsqrt.pop %v1222
        %v1255 = vrsqrt.pop %v1223
        %v1256 = vrsqrt.pop %v1224
        %v1257 = vrsqrt.pop %v1225
        %v1258 = vrsqrt.pop %v1226
        %v1259 = vrsqrt.pop %v1227
        %v1260 = vrsqrt.pop %v1228
        %v1261 = vrsqrt.pop %v1229
        %v1262 = vrsqrt.pop %v1230
        %v1263 = vrsqrt.pop %v1231
        %v1264 = vrsqrt.pop %v1232
        %v1265 = vrsqrt.pop %v1233
        %v1266 = vrsqrt.pop %v1234
        %v1267 = vrsqrt.pop %v1235
        %v1268 = vrsqrt.pop %v1236
        %v1269 = vrsqrt.pop %v1237
        %v1270 = vrsqrt.pop %v1238
        %v1271 = vrsqrt.pop %v1239
        %v1272 = vrsqrt.pop %v1240
        %v1273 = vrsqrt.pop %v1241
        %v1274 = vrsqrt.pop %v1242
        %v1275 = vrsqrt.pop %v1243
        %v1276 = vrsqrt.pop %v1244
        %v1277 = vrsqrt.pop %v1245
        %v1278 = vmul.f32 %v1054, %v1246
        %v1279 = vmul.f32 %v1055, %v1247
        %v1280 = vmul.f32 %v1056, %v1248
        %v1281 = vmul.f32 %v1057, %v1249
        %v1282 = vmul.f32 %v1058, %v1250
        %v1283 = vmul.f32 %v1059, %v1251
        %v1284 = vmul.f32 %v1060, %v1252
        %v1285 = vmul.f32 %v1061, %v1253
        %v1286 = vmul.f32 %v1062, %v1254
        %v1287 = vmul.f32 %v1063, %v1255
        %v1288 = vmul.f32 %v1064, %v1256
        %v1289 = vmul.f32 %v1065, %v1257
        %v1290 = vmul.f32 %v1066, %v1258
        %v1291 = vmul.f32 %v1067, %v1259
        %v1292 = vmul.f32 %v1068, %v1260
        %v1293 = vmul.f32 %v1069, %v1261
        %v1294 = vmul.f32 %v1070, %v1262
        %v1295 = vmul.f32 %v1071, %v1263
        %v1296 = vmul.f32 %v1072, %v1264
        %v1297 = vmul.f32 %v1073, %v1265
        %v1298 = vmul.f32 %v1074, %v1266
        %v1299 = vmul.f32 %v1075, %v1267
        %v1300 = vmul.f32 %v1076, %v1268
        %v1301 = vmul.f32 %v1077, %v1269
        %v1302 = vmul.f32 %v1078, %v1270
        %v1303 = vmul.f32 %v1079, %v1271
        %v1304 = vmul.f32 %v1080, %v1272
        %v1305 = vmul.f32 %v1081, %v1273
        %v1306 = vmul.f32 %v1082, %v1274
        %v1307 = vmul.f32 %v1083, %v1275
        %v1308 = vmul.f32 %v1084, %v1276
        %v1309 = vmul.f32 %v1085, %v1277
        %v1310 = vld [vmem:[%s5] sm:$0x1]
        %v1312 = vlaneseq
        %v1313 = vshrl.u32 %v1312, 7
        %v1314 = vsub.s32 0, %v1313
        %v1315 = vrot.slane %v1310, %v1314
        %v1317 = vmul.f32 %v1278, %v1315
        %v1318 = vmul.f32 %v1279, %v1315
        %v1319 = vmul.f32 %v1280, %v1315
        %v1320 = vmul.f32 %v1281, %v1315
        %v1321 = vmul.f32 %v1282, %v1315
        %v1322 = vmul.f32 %v1283, %v1315
        %v1323 = vmul.f32 %v1284, %v1315
        %v1324 = vmul.f32 %v1285, %v1315
        %v1325 = vmul.f32 %v1286, %v1315
        %v1326 = vmul.f32 %v1287, %v1315
        %v1327 = vmul.f32 %v1288, %v1315
        %v1328 = vmul.f32 %v1289, %v1315
        %v1329 = vmul.f32 %v1290, %v1315
        %v1330 = vmul.f32 %v1291, %v1315
        %v1331 = vmul.f32 %v1292, %v1315
        %v1332 = vmul.f32 %v1293, %v1315
        %v1333 = vmul.f32 %v1294, %v1315
        %v1334 = vmul.f32 %v1295, %v1315
        %v1335 = vmul.f32 %v1296, %v1315
        %v1336 = vmul.f32 %v1297, %v1315
        %v1337 = vmul.f32 %v1298, %v1315
        %v1338 = vmul.f32 %v1299, %v1315
        %v1339 = vmul.f32 %v1300, %v1315
        %v1340 = vmul.f32 %v1301, %v1315
        %v1341 = vmul.f32 %v1302, %v1315
        %v1342 = vmul.f32 %v1303, %v1315
        %v1343 = vmul.f32 %v1304, %v1315
        %v1344 = vmul.f32 %v1305, %v1315
        %v1345 = vmul.f32 %v1306, %v1315
        %v1346 = vmul.f32 %v1307, %v1315
        %v1347 = vmul.f32 %v1308, %v1315
        %v1348 = vmul.f32 %v1309, %v1315
        %v1349 = vld [vmem:[%s6] sm:$0x1]
        %v1351 = vlaneseq
        %v1352 = vshrl.u32 %v1351, 7
        %v1353 = vsub.s32 0, %v1352
        %v1354 = vrot.slane %v1349, %v1353
        %v1356 = vadd.f32 %v1317, %v1354
        %v1357 = vadd.f32 %v1318, %v1354
        %v1358 = vadd.f32 %v1319, %v1354
        %v1359 = vadd.f32 %v1320, %v1354
        %v1360 = vadd.f32 %v1321, %v1354
        %v1361 = vadd.f32 %v1322, %v1354
        %v1362 = vadd.f32 %v1323, %v1354
        %v1363 = vadd.f32 %v1324, %v1354
        %v1364 = vadd.f32 %v1325, %v1354
        %v1365 = vadd.f32 %v1326, %v1354
        %v1366 = vadd.f32 %v1327, %v1354
        %v1367 = vadd.f32 %v1328, %v1354
        %v1368 = vadd.f32 %v1329, %v1354
        %v1369 = vadd.f32 %v1330, %v1354
        %v1370 = vadd.f32 %v1331, %v1354
        %v1371 = vadd.f32 %v1332, %v1354
        %v1372 = vadd.f32 %v1333, %v1354
        %v1373 = vadd.f32 %v1334, %v1354
        %v1374 = vadd.f32 %v1335, %v1354
        %v1375 = vadd.f32 %v1336, %v1354
        %v1376 = vadd.f32 %v1337, %v1354
        %v1377 = vadd.f32 %v1338, %v1354
        %v1378 = vadd.f32 %v1339, %v1354
        %v1379 = vadd.f32 %v1340, %v1354
        %v1380 = vadd.f32 %v1341, %v1354
        %v1381 = vadd.f32 %v1342, %v1354
        %v1382 = vadd.f32 %v1343, %v1354
        %v1383 = vadd.f32 %v1344, %v1354
        %v1384 = vadd.f32 %v1345, %v1354
        %v1385 = vadd.f32 %v1346, %v1354
        %v1386 = vadd.f32 %v1347, %v1354
        %v1387 = vadd.f32 %v1348, %v1354
        %1388 = vst [vmem:[%s325] sm:$0xff] %v1356
        %1389 = vst [vmem:[%s325 + $0x8] sm:$0xff] %v1357
        %1390 = vst [vmem:[%s325 + $0x10] sm:$0xff] %v1358
        %1391 = vst [vmem:[%s325 + $0x18] sm:$0xff] %v1359
        %1392 = vst [vmem:[%s325 + $0x20] sm:$0xff] %v1360
        %1393 = vst [vmem:[%s325 + $0x28] sm:$0xff] %v1361
        %1394 = vst [vmem:[%s325 + $0x30] sm:$0xff] %v1362
        %1395 = vst [vmem:[%s325 + $0x38] sm:$0xff] %v1363
        %1396 = vst [vmem:[%s325 + $0x40] sm:$0xff] %v1364
        %1397 = vst [vmem:[%s325 + $0x48] sm:$0xff] %v1365
        %1398 = vst [vmem:[%s325 + $0x50] sm:$0xff] %v1366
        %1399 = vst [vmem:[%s325 + $0x58] sm:$0xff] %v1367
        %1400 = vst [vmem:[%s325 + $0x60] sm:$0xff] %v1368
        %1401 = vst [vmem:[%s325 + $0x68] sm:$0xff] %v1369
        %1402 = vst [vmem:[%s325 + $0x70] sm:$0xff] %v1370
        %1403 = vst [vmem:[%s325 + $0x78] sm:$0xff] %v1371
        %1404 = vst [vmem:[%s325 + $0x80] sm:$0xff] %v1372
        %1405 = vst [vmem:[%s325 + $0x88] sm:$0xff] %v1373
        %1406 = vst [vmem:[%s325 + $0x90] sm:$0xff] %v1374
        %1407 = vst [vmem:[%s325 + $0x98] sm:$0xff] %v1375
        %1408 = vst [vmem:[%s325 + $0xa0] sm:$0xff] %v1376
        %1409 = vst [vmem:[%s325 + $0xa8] sm:$0xff] %v1377
        %1410 = vst [vmem:[%s325 + $0xb0] sm:$0xff] %v1378
        %1411 = vst [vmem:[%s325 + $0xb8] sm:$0xff] %v1379
        %1412 = vst [vmem:[%s325 + $0xc0] sm:$0xff] %v1380
        %1413 = vst [vmem:[%s325 + $0xc8] sm:$0xff] %v1381
        %1414 = vst [vmem:[%s325 + $0xd0] sm:$0xff] %v1382
        %1415 = vst [vmem:[%s325 + $0xd8] sm:$0xff] %v1383
        %1416 = vst [vmem:[%s325 + $0xe0] sm:$0xff] %v1384
        %1417 = vst [vmem:[%s325 + $0xe8] sm:$0xff] %v1385
        %1418 = vst [vmem:[%s325 + $0xf0] sm:$0xff] %v1386
        %1419 = vst [vmem:[%s325 + $0xf8] sm:$0xff] %v1387
        %s1420 = sand.u32 %s185, 1
        %s1421 = scalar_lea.sflag [#allocation4], %s1420
        %s1422 = sand.u32 %s185, 1
        %s1423 = smul.addr %s1422, 256
        %s1424 = scalar_lea.vmem [#allocation8], %s1423
        // Predicated region
        $region61: #{tpu_custom_call.1} parent=47 // pred_check
          %p1425 = pneg %p195
        $region62: #{tpu_custom_call.1} parent=47 // pred_check_branch
          %1427 = sbr.rel (%p1425) target = $region64
        $region63: #{tpu_custom_call.1} parent=47 // pred_region
          %s1428 = smul.u32 32, %s25
          %s1430 = ssub.s32 4096, 4096
          %1431 = vsyncadd %s1421, %s1430
          %s1432 = smul.addr %s1428, 128
          %s1433 = scalar_lea.hbm %s7, %s1432
          %s1434 = sshll.u32 %s1424, 4
          %s1435 = int_to_ptr.vmem [resolvable:$true] %s1434
          %1440 = dma.vmem_to_hbm [thread:$0]  %s1435, 4096, %s1433, %s1421, 128, 128, 8
        $region64: #{tpu_custom_call.1} parent=47 // pred_fallthru
          _
      $region48: #{tpu_custom_call.1} parent=5 // pred_fallthru
        _
      %p1441 = scmp.le.s32.totalorder 2, %s20
      // Predicated region
      $region65: #{tpu_custom_call.1} parent=5 // pred_check
        %p1442 = pneg %p1441
      $region66: #{tpu_custom_call.1} parent=5 // pred_check_branch
        %1444 = sbr.rel (%p1442) target = $region68
      $region67: #{tpu_custom_call.1} parent=5 // pred_region
        %s1445 = ssub.s32 %s20, 2
        // Predicated region
        $region69: #{tpu_custom_call.1} parent=67 // pred_check
          %p1446 = pneg %p201
        $region70: #{tpu_custom_call.1} parent=67 // pred_check_branch
          %1448 = sbr.rel (%p1446) target = $region72
        $region71: #{tpu_custom_call.1} parent=67 // pred_region
          %s1449 = sand.u32 %s186, 1
          %s1450 = scalar_lea.sflag [#allocation4], %s1449
          %s1451 = sand.u32 %s186, 1
          %s1452 = smul.addr %s1451, 256
          %s1453 = scalar_lea.vmem [#allocation8], %s1452
          %1454 = dma.done %s1450, 4096
        $region72: #{tpu_custom_call.1} parent=67 // pred_fallthru
          _
      $region68: #{tpu_custom_call.1} parent=5 // pred_fallthru
        _
    $region6: #{tpu_custom_call.1} parent=1 // loop_footer
      %s24 = sadd.s32 1, %s20
    $region7: #{tpu_custom_call.1} parent=1 // loop_footer_branch
      %19 = sbr.rel target = $region3
    $region8: #{tpu_custom_call.1} parent=1 // loop_exit
      _
    %1455 = vsyncpa [#allocation3], 1
    %s1456 = scalar_lea.sflag [#allocation3], 1
    %1457 = vsyncpa %s1456, 1
    %1458 = vsyncpa [#allocation6], 1
    %1459 = vsyncpa [#allocation4], 1
    %s1460 = scalar_lea.sflag [#allocation4], 1
    %1461 = vsyncpa %s1460, 1

</llo_original>
